<compile_context>
chip_gen: v6e
topology: v6e:2x2x1
jax: 0.10.0
libtpu: 0.0.40
codegen_flags: <defaults>
</compile_context>

<pallas_src>
import functools

import jax
import jax.numpy as jnp
from jax.experimental import pallas as pl
from jax.experimental.pallas import tpu as pltpu


def convlstm_cell_kernel(patch_ref, w_ref, b_ref, c_ref, h_out_ref, c_out_ref,
                         *, hidden):
    """Fused conv-as-matmul + LSTM gate math for one pixel chunk.

    Layout: channels on sublanes, pixels on lanes.
      patch_ref : (K_pad, P_chunk)   bf16  transposed im2col of concat([x, h])
      w_ref     : (4*hidden, K_pad)  bf16  conv weight, K order = (dy, dx, cin)
      b_ref     : (4*hidden, 1)      f32   conv bias
      c_ref     : (hidden, P_chunk)  f32   current cell state
      h_out_ref : (hidden, P_chunk)  f32   next hidden state
      c_out_ref : (hidden, P_chunk)  f32   next cell state
    """
    # Single deep-K MXU matmul: bf16 operands, f32 accumulation.
    # The bias is folded into the same accumulator expression (one pass).
    gates = jnp.dot(w_ref[...], patch_ref[...],
                    preferred_element_type=jnp.float32) + b_ref[...]

    # One full-width activation pass over the whole (4*hidden, P) accumulator:
    # rows [0, 3*hidden) are sigmoid gates (i, f, o), rows [3h, 4h) are tanh
    # (g).  sigmoid(x) = 0.5*(1 + tanh(x/2)), so a single EUP tanh suffices.
    row = jax.lax.broadcasted_iota(jnp.int32, gates.shape, 0)
    is_sig = row < 3 * hidden
    t = jnp.tanh(jnp.where(is_sig, 0.5 * gates, gates))
    act = jnp.where(is_sig, 0.5 * (t + 1.0), t)

    # Gate slices along the sublane axis (offsets are multiples of 8 -> cheap).
    i = act[0 * hidden:1 * hidden, :]
    f = act[1 * hidden:2 * hidden, :]
    o = act[2 * hidden:3 * hidden, :]
    g = act[3 * hidden:4 * hidden, :]

    c_next = f * c_ref[...] + i * g
    h_out_ref[...] = (o * jnp.tanh(c_next)).astype(h_out_ref.dtype)
    c_out_ref[...] = c_next.astype(c_out_ref.dtype)


def convlstm_cell_forward(x, h_cur, c_cur, w_oihw, bias, *, num_pixel_blocks=1):
    """ConvLSTM cell forward, NCHW in / NCHW out (matches the PyTorch module).

    num_pixel_blocks: number of "parallel" grid blocks along the pixel axis.
      1 is optimal on single-TensorCore chips (v5e/v6e); use 2 on dual-TC
      v7x so both cores get half of the pixels.
    """
    B, Cx, H, W = x.shape
    hidden = h_cur.shape[1]
    C4, Cin, KH, KW = w_oihw.shape
    assert Cin == Cx + hidden and C4 == 4 * hidden
    # The symmetric zero padding below matches PyTorch padding='same' only for
    # odd kernel sizes (stride 1); even kernels would need asymmetric padding.
    assert KH % 2 == 1 and KW % 2 == 1

    P = B * H * W
    K = KH * KW * Cin
    K_pad = ((K + 127) // 128) * 128   # zero-pad K for clean MXU tiling

    # ---- XLA-side glue: concat + 'same' zero pad + transposed im2col ------
    combined = jnp.concatenate([x, h_cur], axis=1)                # (B, Cin, H, W)
    comb_pad = jnp.pad(
        combined, ((0, 0), (0, 0), (KH // 2, KH // 2), (KW // 2, KW // 2)))
    # patch[(dy*KW + dx)*Cin + c, (b*H + y)*W + x] = comb_pad[b, c, y+dy, x+dx]
    windows = [comb_pad[:, :, dy:dy + H, dx:dx + W]               # (B, Cin, H, W)
               for dy in range(KH) for dx in range(KW)]
    patch = jnp.stack(windows, axis=0)                            # (KH*KW, B, Cin, H, W)
    patch = jnp.transpose(patch, (0, 2, 1, 3, 4)).reshape(K, P)
    patch = jnp.pad(patch, ((0, K_pad - K), (0, 0))).astype(jnp.bfloat16)

    # Conv weight OIHW -> (4*hidden, KH*KW*Cin), K ordering matching `patch`.
    w2d = jnp.transpose(w_oihw, (0, 2, 3, 1)).reshape(C4, K)
    w2d = jnp.pad(w2d, ((0, 0), (0, K_pad - K))).astype(jnp.bfloat16)
    b2d = bias.reshape(C4, 1).astype(jnp.float32)

    # Cell state with pixels on the lane axis (lane-dense load / combine).
    c2d = jnp.transpose(c_cur, (1, 0, 2, 3)).reshape(hidden, P)

    assert P % num_pixel_blocks == 0
    chunk = P // num_pixel_blocks
    assert chunk % 128 == 0, "pixel chunk must stay lane-aligned"

    kernel = functools.partial(convlstm_cell_kernel, hidden=hidden)
    h2d, c2d_next = pl.pallas_call(
        kernel,
        out_shape=(jax.ShapeDtypeStruct((hidden, P), jnp.float32),
                   jax.ShapeDtypeStruct((hidden, P), jnp.float32)),
        grid_spec=pltpu.PrefetchScalarGridSpec(
            num_scalar_prefetch=0,
            grid=(num_pixel_blocks,),
            in_specs=[
                pl.BlockSpec((K_pad, chunk), lambda p: (0, p)),
                pl.BlockSpec((C4, K_pad), lambda p: (0, 0)),
                pl.BlockSpec((C4, 1), lambda p: (0, 0)),
                pl.BlockSpec((hidden, chunk), lambda p: (0, p)),
            ],
            out_specs=[
                pl.BlockSpec((hidden, chunk), lambda p: (0, p)),
                pl.BlockSpec((hidden, chunk), lambda p: (0, p)),
            ],
        ),
        compiler_params=pltpu.CompilerParams(
            dimension_semantics=("parallel",)),
    )(patch, w2d, b2d, c2d)

    # Back to PyTorch NCHW.
    h_next = jnp.transpose(h2d.reshape(hidden, B, H, W), (1, 0, 2, 3))
    c_next = jnp.transpose(c2d_next.reshape(hidden, B, H, W), (1, 0, 2, 3))
    return h_next, c_next


def reference_forward(x, h_cur, c_cur, w_oihw, bias):
    """Pure-JAX f32 reference of ConvLSTMCell.forward (NCHW, PyTorch semantics)."""
    hidden = h_cur.shape[1]
    combined = jnp.concatenate([x, h_cur], axis=1)
    conv = jax.lax.conv_general_dilated(
        combined, w_oihw, window_strides=(1, 1), padding='SAME',
        dimension_numbers=('NCHW', 'OIHW', 'NCHW'))
    conv = conv + bias.reshape(1, -1, 1, 1)
    i = jax.nn.sigmoid(conv[:, 0 * hidden:1 * hidden])
    f = jax.nn.sigmoid(conv[:, 1 * hidden:2 * hidden])
    o = jax.nn.sigmoid(conv[:, 2 * hidden:3 * hidden])
    g = jnp.tanh(conv[:, 3 * hidden:4 * hidden])
    c_next = f * c_cur + i * g
    h_next = o * jnp.tanh(c_next)
    return h_next, c_next


if __name__ == "__main__":
    # Module config: ConvLSTMCell(input_size=4, hidden_size=32,
    #                             kernel_size=(3, 3), bias=True)
    B, Cx, Hsp, Wsp = 2, 4, 16, 16
    hidden = 32
    KH, KW = 3, 3
    Cin = Cx + hidden

    key = jax.random.PRNGKey(0)
    kx, kh, kc, kw_, kb = jax.random.split(key, 5)

    # Parameters in PyTorch conventions (Conv2d weight OIHW, bias (4*hidden,)).
    w_oihw = jax.random.normal(kw_, (4 * hidden, Cin, KH, KW), jnp.float32) * 0.05
    bias = jax.random.normal(kb, (4 * hidden,), jnp.float32) * 0.05

    # Inputs in PyTorch NCHW convention.
    x_nchw = jax.random.normal(kx, (B, Cx, Hsp, Wsp), jnp.float32)
    h_nchw = jax.random.normal(kh, (B, hidden, Hsp, Wsp), jnp.float32)
    c_nchw = jax.random.normal(kc, (B, hidden, Hsp, Wsp), jnp.float32)

    fwd = jax.jit(convlstm_cell_forward)
    h_next, c_next = fwd(x_nchw, h_nchw, c_nchw, w_oihw, bias)
    jax.block_until_ready((h_next, c_next))

    # Correctness check against the pure-f32 reference.  Tolerance is loosened
    # vs v1 because the conv operands are fed to the MXU in bf16 (accumulation
    # stays f32, keeping the error at the ~1e-3 level).
    h_ref, c_ref = reference_forward(x_nchw, h_nchw, c_nchw, w_oihw, bias)

    assert h_next.shape == (B, hidden, Hsp, Wsp)
    assert c_next.shape == (B, hidden, Hsp, Wsp)
    assert jnp.allclose(h_next, h_ref, atol=2e-2, rtol=2e-2), (
        "h max abs err = %f" % float(jnp.max(jnp.abs(h_next - h_ref))))
    assert jnp.allclose(c_next, c_ref, atol=2e-2, rtol=2e-2), (
        "c max abs err = %f" % float(jnp.max(jnp.abs(c_next - c_ref))))

    print("KERNEL_OK")
</pallas_src>

<mosaic_0001>
module attributes {stable_mosaic.version = 11 : i64} {
  func.func @convlstm_cell_kernel(%arg0: i32, %arg1: memref<384x512xbf16, #tpu.memory_space<vmem>>, %arg2: memref<128x384xbf16, #tpu.memory_space<vmem>>, %arg3: memref<128x1xf32, #tpu.memory_space<vmem>>, %arg4: memref<32x512xf32, #tpu.memory_space<vmem>>, %arg5: memref<32x512xf32, #tpu.memory_space<vmem>>, %arg6: memref<32x512xf32, #tpu.memory_space<vmem>>) attributes {dimension_semantics = [#tpu.dimension_semantics<parallel>], iteration_bounds = array<i64: 1>, scalar_prefetch = 0 : i64, scratch_operands = 0 : i64, tpu.core_type = #tpu.core_type<tc>, window_params = [{transform_indices = @transform_0, window_bounds = array<i64: 384, 512>}, {pipeline_mode = #tpu.pipeline_mode<synchronous>, transform_indices = @transform_1, window_bounds = array<i64: 128, 384>}, {pipeline_mode = #tpu.pipeline_mode<synchronous>, transform_indices = @transform_2, window_bounds = array<i64: 128, 1>}, {transform_indices = @transform_3, window_bounds = array<i64: 32, 512>}, {transform_indices = @transform_4, window_bounds = array<i64: 32, 512>}, {transform_indices = @transform_5, window_bounds = array<i64: 32, 512>}]} {
    %c0 = arith.constant 0 : index
    %c0_0 = arith.constant 0 : index
    %0 = vector.load %arg2[%c0, %c0_0] : memref<128x384xbf16, #tpu.memory_space<vmem>>, vector<128x384xbf16>
    %c0_1 = arith.constant 0 : index
    %c0_2 = arith.constant 0 : index
    %1 = vector.load %arg1[%c0_1, %c0_2] : memref<384x512xbf16, #tpu.memory_space<vmem>>, vector<384x512xbf16>
    %cst = arith.constant dense<0.000000e+00> : vector<128x512xf32>
    %2 = tpu.matmul %0, %1, %cst {dimension_numbers = #tpu.dot_dimension_numbers<[1], [0], [0], [1], [0, 0, 1, 1], [], []>} : vector<128x384xbf16>, vector<384x512xbf16>, vector<128x512xf32> -> vector<128x512xf32>
    %c0_3 = arith.constant 0 : index
    %c0_4 = arith.constant 0 : index
    %3 = vector.load %arg3[%c0_3, %c0_4] : memref<128x1xf32, #tpu.memory_space<vmem>>, vector<128x1xf32>
    %4 = vector.broadcast %3 : vector<128x1xf32> to vector<128x512xf32>
    %5 = arith.addf %2, %4 : vector<128x512xf32>
    %6 = tpu.iota {dimensions = array<i32: 0>} : vector<128x512xi32>
    %c96_i32 = arith.constant 96 : i32
    %7 = vector.broadcast %c96_i32 : i32 to vector<128x512xi32>
    %8 = arith.cmpi slt, %6, %7 : vector<128x512xi32>
    %cst_5 = arith.constant 5.000000e-01 : f32
    %9 = vector.broadcast %cst_5 : f32 to vector<128x512xf32>
    %10 = arith.mulf %9, %5 : vector<128x512xf32>
    %11 = arith.select %8, %10, %5 : vector<128x512xi1>, vector<128x512xf32>
    %12 = math.tanh %11 : vector<128x512xf32>
    %cst_6 = arith.constant 1.000000e+00 : f32
    %13 = vector.broadcast %cst_6 : f32 to vector<128x512xf32>
    %14 = arith.addf %12, %13 : vector<128x512xf32>
    %cst_7 = arith.constant 5.000000e-01 : f32
    %15 = vector.broadcast %cst_7 : f32 to vector<128x512xf32>
    %16 = arith.mulf %15, %14 : vector<128x512xf32>
    %17 = arith.select %8, %16, %12 : vector<128x512xi1>, vector<128x512xf32>
    %18 = vector.extract_strided_slice %17 {offsets = [0, 0], sizes = [32, 512], strides = [1, 1]} : vector<128x512xf32> to vector<32x512xf32>
    %19 = vector.extract_strided_slice %17 {offsets = [32, 0], sizes = [32, 512], strides = [1, 1]} : vector<128x512xf32> to vector<32x512xf32>
    %20 = vector.extract_strided_slice %17 {offsets = [64, 0], sizes = [32, 512], strides = [1, 1]} : vector<128x512xf32> to vector<32x512xf32>
    %21 = vector.extract_strided_slice %17 {offsets = [96, 0], sizes = [32, 512], strides = [1, 1]} : vector<128x512xf32> to vector<32x512xf32>
    %c0_8 = arith.constant 0 : index
    %c0_9 = arith.constant 0 : index
    %22 = vector.load %arg4[%c0_8, %c0_9] : memref<32x512xf32, #tpu.memory_space<vmem>>, vector<32x512xf32>
    %23 = arith.mulf %19, %22 : vector<32x512xf32>
    %24 = arith.mulf %18, %21 : vector<32x512xf32>
    %25 = arith.addf %23, %24 : vector<32x512xf32>
    %26 = math.tanh %25 : vector<32x512xf32>
    %27 = arith.mulf %20, %26 : vector<32x512xf32>
    %c0_10 = arith.constant 0 : index
    %c0_11 = arith.constant 0 : index
    %28 = vector.load %arg5[%c0_10, %c0_11] : memref<32x512xf32, #tpu.memory_space<vmem>>, vector<32x512xf32>
    tpu.vector_store %arg5[%c0_10, %c0_11], %27 {strides = array<i32>} : memref<32x512xf32, #tpu.memory_space<vmem>>, vector<32x512xf32>,
    %c0_12 = arith.constant 0 : index
    %c0_13 = arith.constant 0 : index
    %29 = vector.load %arg6[%c0_12, %c0_13] : memref<32x512xf32, #tpu.memory_space<vmem>>, vector<32x512xf32>
    tpu.vector_store %arg6[%c0_12, %c0_13], %25 {strides = array<i32>} : memref<32x512xf32, #tpu.memory_space<vmem>>, vector<32x512xf32>,
    return
  }
  func.func @transform_0(%arg0: i32) -> (i32, i32) {
    %c0_i32 = arith.constant 0 : i32
    %c0_i32_0 = arith.constant 0 : i32
    return %c0_i32, %arg0 : i32, i32
  }
  func.func @transform_1(%arg0: i32) -> (i32, i32) {
    %c0_i32 = arith.constant 0 : i32
    %c0_i32_0 = arith.constant 0 : i32
    %c0_i32_1 = arith.constant 0 : i32
    return %c0_i32, %c0_i32_0 : i32, i32
  }
  func.func @transform_2(%arg0: i32) -> (i32, i32) {
    %c0_i32 = arith.constant 0 : i32
    %c0_i32_0 = arith.constant 0 : i32
    %c0_i32_1 = arith.constant 0 : i32
    return %c0_i32, %c0_i32_0 : i32, i32
  }
  func.func @transform_3(%arg0: i32) -> (i32, i32) {
    %c0_i32 = arith.constant 0 : i32
    %c0_i32_0 = arith.constant 0 : i32
    return %c0_i32, %arg0 : i32, i32
  }
  func.func @transform_4(%arg0: i32) -> (i32, i32) {
    %c0_i32 = arith.constant 0 : i32
    %c0_i32_0 = arith.constant 0 : i32
    return %c0_i32, %arg0 : i32, i32
  }
  func.func @transform_5(%arg0: i32) -> (i32, i32) {
    %c0_i32 = arith.constant 0 : i32
    %c0_i32_0 = arith.constant 0 : i32
    return %c0_i32, %arg0 : i32, i32
  }
}

</mosaic_0001>

<llo_original>
// kernel: convlstm_cell_forward.1
$region0: #{convlstm_cell_forward.1}
  #allocation0 [shape = 'u32[]', space=smem, size = 0x4, offset = 0x4, fixed_abs, tag = 'smem constant byte address 0x4 - core index']
  #allocation1 [shape = 'u32[144,128]{1,0:T(1,128)}', space=vmem, size = 0x12000, scoped, tag = 'internal scratch']
  %s0 = inlined_call_operand.vmem [shape: bf16[384,512], index: 0, kind: input, shape index: {}]
  %s1 = inlined_call_operand.vmem [shape: bf16[128,384], index: 1, kind: input, shape index: {}]
  %s2 = inlined_call_operand.vmem [shape: f32[128,1], index: 2, kind: input, shape index: {}]
  %s3 = inlined_call_operand.vmem [shape: f32[32,512], index: 3, kind: input, shape index: {}]
  %s4 = inlined_call_operand.vmem [shape: f32[32,512], index: 4, kind: output, shape index: {0}]
  %s5 = inlined_call_operand.vmem [shape: f32[32,512], index: 5, kind: output, shape index: {1}]
  %6 = xla_tuple %s4, %s5
  %s7 = sld [smem:[#allocation0]]
  $region34: #{convlstm_cell_forward.1} parent=0
    _
  %s9 = ssub.s32 1, %s7
  %s10 = scalar_select 0, %s9, %s7
  // Predicated region
  $region2: #{convlstm_cell_forward.1} parent=0 // pred_check
    _
  $region3: #{convlstm_cell_forward.1} parent=0 // pred_check_branch
    %12 = sbr.rel (0) target = $region5
  $region4: #{convlstm_cell_forward.1} parent=0 // pred_region
    _
  $region5: #{convlstm_cell_forward.1} parent=0 // pred_fallthru
    _
  // Predicated region
  $region6: #{convlstm_cell_forward.1} parent=0 // pred_check
    _
  $region7: #{convlstm_cell_forward.1} parent=0 // pred_check_branch
    %14 = sbr.rel (0) target = $region9
  $region8: #{convlstm_cell_forward.1} parent=0 // pred_region
    _
  $region9: #{convlstm_cell_forward.1} parent=0 // pred_fallthru
    _
  // Predicated region
  $region10: #{convlstm_cell_forward.1} parent=0 // pred_check
    _
  $region11: #{convlstm_cell_forward.1} parent=0 // pred_check_branch
    %16 = sbr.rel (0) target = $region13
  $region12: #{convlstm_cell_forward.1} parent=0 // pred_region
    _
  $region13: #{convlstm_cell_forward.1} parent=0 // pred_fallthru
    _
  // Predicated region
  $region14: #{convlstm_cell_forward.1} parent=0 // pred_check
    _
  $region15: #{convlstm_cell_forward.1} parent=0 // pred_check_branch
    %18 = sbr.rel (0) target = $region17
  $region16: #{convlstm_cell_forward.1} parent=0 // pred_region
    _
  $region17: #{convlstm_cell_forward.1} parent=0 // pred_fallthru
    _
  %v20 = vld [vmem:[%s1] sm:$0xff]
  %v21 = vld [vmem:[%s1 + $0x8] sm:$0xf]
  %v22 = vld [vmem:[%s1 + $0xc] sm:$0xff]
  %v23 = vld [vmem:[%s1 + $0x14] sm:$0xf]
  %v24 = vld [vmem:[%s1 + $0x18] sm:$0xff]
  %v25 = vld [vmem:[%s1 + $0x20] sm:$0xf]
  %v26 = vld [vmem:[%s1 + $0x24] sm:$0xff]
  %v27 = vld [vmem:[%s1 + $0x2c] sm:$0xf]
  %v28 = vld [vmem:[%s1 + $0x30] sm:$0xff]
  %v29 = vld [vmem:[%s1 + $0x38] sm:$0xf]
  %v30 = vld [vmem:[%s1 + $0x3c] sm:$0xff]
  %v31 = vld [vmem:[%s1 + $0x44] sm:$0xf]
  %v32 = vld [vmem:[%s1 + $0x48] sm:$0xff]
  %v33 = vld [vmem:[%s1 + $0x50] sm:$0xf]
  %v34 = vld [vmem:[%s1 + $0x54] sm:$0xff]
  %v35 = vld [vmem:[%s1 + $0x5c] sm:$0xf]
  %v36 = vld [vmem:[%s1 + $0x60] sm:$0xff]
  %v37 = vld [vmem:[%s1 + $0x68] sm:$0xf]
  %v38 = vld [vmem:[%s1 + $0x6c] sm:$0xff]
  %v39 = vld [vmem:[%s1 + $0x74] sm:$0xf]
  %v40 = vld [vmem:[%s1 + $0x78] sm:$0xff]
  %v41 = vld [vmem:[%s1 + $0x80] sm:$0xf]
  %v42 = vld [vmem:[%s1 + $0x84] sm:$0xff]
  %v43 = vld [vmem:[%s1 + $0x8c] sm:$0xf]
  %v44 = vld [vmem:[%s1 + $0x90] sm:$0xff]
  %v45 = vld [vmem:[%s1 + $0x98] sm:$0xf]
  %v46 = vld [vmem:[%s1 + $0x9c] sm:$0xff]
  %v47 = vld [vmem:[%s1 + $0xa4] sm:$0xf]
  %v48 = vld [vmem:[%s1 + $0xa8] sm:$0xff]
  %v49 = vld [vmem:[%s1 + $0xb0] sm:$0xf]
  %v50 = vld [vmem:[%s1 + $0xb4] sm:$0xff]
  %v51 = vld [vmem:[%s1 + $0xbc] sm:$0xf]
  %v52 = vld [vmem:[%s0] sm:$0xff]
  %v53 = vld [vmem:[%s0 + $0x8] sm:$0xff]
  %v54 = vld [vmem:[%s0 + $0x10] sm:$0xff]
  %v55 = vld [vmem:[%s0 + $0x18] sm:$0xff]
  %v56 = vld [vmem:[%s0 + $0x20] sm:$0xff]
  %v57 = vld [vmem:[%s0 + $0x28] sm:$0xff]
  %v58 = vld [vmem:[%s0 + $0x30] sm:$0xff]
  %v59 = vld [vmem:[%s0 + $0x38] sm:$0xff]
  %v60 = vld [vmem:[%s0 + $0x40] sm:$0xff]
  %v61 = vld [vmem:[%s0 + $0x48] sm:$0xff]
  %v62 = vld [vmem:[%s0 + $0x50] sm:$0xff]
  %v63 = vld [vmem:[%s0 + $0x58] sm:$0xff]
  %v64 = vld [vmem:[%s0 + $0x60] sm:$0xff]
  %v65 = vld [vmem:[%s0 + $0x68] sm:$0xff]
  %v66 = vld [vmem:[%s0 + $0x70] sm:$0xff]
  %v67 = vld [vmem:[%s0 + $0x78] sm:$0xff]
  %v68 = vld [vmem:[%s0 + $0x80] sm:$0xff]
  %v69 = vld [vmem:[%s0 + $0x88] sm:$0xff]
  %v70 = vld [vmem:[%s0 + $0x90] sm:$0xff]
  %v71 = vld [vmem:[%s0 + $0x98] sm:$0xff]
  %v72 = vld [vmem:[%s0 + $0xa0] sm:$0xff]
  %v73 = vld [vmem:[%s0 + $0xa8] sm:$0xff]
  %v74 = vld [vmem:[%s0 + $0xb0] sm:$0xff]
  %v75 = vld [vmem:[%s0 + $0xb8] sm:$0xff]
  %v76 = vld [vmem:[%s0 + $0xc0] sm:$0xff]
  %v77 = vld [vmem:[%s0 + $0xc8] sm:$0xff]
  %v78 = vld [vmem:[%s0 + $0xd0] sm:$0xff]
  %v79 = vld [vmem:[%s0 + $0xd8] sm:$0xff]
  %v80 = vld [vmem:[%s0 + $0xe0] sm:$0xff]
  %v81 = vld [vmem:[%s0 + $0xe8] sm:$0xff]
  %v82 = vld [vmem:[%s0 + $0xf0] sm:$0xff]
  %v83 = vld [vmem:[%s0 + $0xf8] sm:$0xff]
  %v84 = vld [vmem:[%s0 + $0x100] sm:$0xff]
  %v85 = vld [vmem:[%s0 + $0x108] sm:$0xff]
  %v86 = vld [vmem:[%s0 + $0x110] sm:$0xff]
  %v87 = vld [vmem:[%s0 + $0x118] sm:$0xff]
  %v88 = vld [vmem:[%s0 + $0x120] sm:$0xff]
  %v89 = vld [vmem:[%s0 + $0x128] sm:$0xff]
  %v90 = vld [vmem:[%s0 + $0x130] sm:$0xff]
  %v91 = vld [vmem:[%s0 + $0x138] sm:$0xff]
  %v92 = vld [vmem:[%s0 + $0x140] sm:$0xff]
  %v93 = vld [vmem:[%s0 + $0x148] sm:$0xff]
  %v94 = vld [vmem:[%s0 + $0x150] sm:$0xff]
  %v95 = vld [vmem:[%s0 + $0x158] sm:$0xff]
  %v96 = vld [vmem:[%s0 + $0x160] sm:$0xff]
  %v97 = vld [vmem:[%s0 + $0x168] sm:$0xff]
  %v98 = vld [vmem:[%s0 + $0x170] sm:$0xff]
  %v99 = vld [vmem:[%s0 + $0x178] sm:$0xff]
  %v100 = vld [vmem:[%s0 + $0x180] sm:$0xff]
  %v101 = vld [vmem:[%s0 + $0x188] sm:$0xff]
  %v102 = vld [vmem:[%s0 + $0x190] sm:$0xff]
  %v103 = vld [vmem:[%s0 + $0x198] sm:$0xff]
  %v104 = vld [vmem:[%s0 + $0x1a0] sm:$0xff]
  %v105 = vld [vmem:[%s0 + $0x1a8] sm:$0xff]
  %v106 = vld [vmem:[%s0 + $0x1b0] sm:$0xff]
  %v107 = vld [vmem:[%s0 + $0x1b8] sm:$0xff]
  %v108 = vld [vmem:[%s0 + $0x1c0] sm:$0xff]
  %v109 = vld [vmem:[%s0 + $0x1c8] sm:$0xff]
  %v110 = vld [vmem:[%s0 + $0x1d0] sm:$0xff]
  %v111 = vld [vmem:[%s0 + $0x1d8] sm:$0xff]
  %v112 = vld [vmem:[%s0 + $0x1e0] sm:$0xff]
  %v113 = vld [vmem:[%s0 + $0x1e8] sm:$0xff]
  %v114 = vld [vmem:[%s0 + $0x1f0] sm:$0xff]
  %v115 = vld [vmem:[%s0 + $0x1f8] sm:$0xff]
  %v116 = vld [vmem:[%s0 + $0x200] sm:$0xff]
  %v117 = vld [vmem:[%s0 + $0x208] sm:$0xff]
  %v118 = vld [vmem:[%s0 + $0x210] sm:$0xff]
  %v119 = vld [vmem:[%s0 + $0x218] sm:$0xff]
  %v120 = vld [vmem:[%s0 + $0x220] sm:$0xff]
  %v121 = vld [vmem:[%s0 + $0x228] sm:$0xff]
  %v122 = vld [vmem:[%s0 + $0x230] sm:$0xff]
  %v123 = vld [vmem:[%s0 + $0x238] sm:$0xff]
  %v124 = vld [vmem:[%s0 + $0x240] sm:$0xff]
  %v125 = vld [vmem:[%s0 + $0x248] sm:$0xff]
  %v126 = vld [vmem:[%s0 + $0x250] sm:$0xff]
  %v127 = vld [vmem:[%s0 + $0x258] sm:$0xff]
  %v128 = vld [vmem:[%s0 + $0x260] sm:$0xff]
  %v129 = vld [vmem:[%s0 + $0x268] sm:$0xff]
  %v130 = vld [vmem:[%s0 + $0x270] sm:$0xff]
  %v131 = vld [vmem:[%s0 + $0x278] sm:$0xff]
  %v132 = vld [vmem:[%s0 + $0x280] sm:$0xff]
  %v133 = vld [vmem:[%s0 + $0x288] sm:$0xff]
  %v134 = vld [vmem:[%s0 + $0x290] sm:$0xff]
  %v135 = vld [vmem:[%s0 + $0x298] sm:$0xff]
  %v136 = vld [vmem:[%s0 + $0x2a0] sm:$0xff]
  %v137 = vld [vmem:[%s0 + $0x2a8] sm:$0xff]
  %v138 = vld [vmem:[%s0 + $0x2b0] sm:$0xff]
  %v139 = vld [vmem:[%s0 + $0x2b8] sm:$0xff]
  %v140 = vld [vmem:[%s0 + $0x2c0] sm:$0xff]
  %v141 = vld [vmem:[%s0 + $0x2c8] sm:$0xff]
  %v142 = vld [vmem:[%s0 + $0x2d0] sm:$0xff]
  %v143 = vld [vmem:[%s0 + $0x2d8] sm:$0xff]
  %v144 = vld [vmem:[%s0 + $0x2e0] sm:$0xff]
  %v145 = vld [vmem:[%s0 + $0x2e8] sm:$0xff]
  %v146 = vld [vmem:[%s0 + $0x2f0] sm:$0xff]
  %v147 = vld [vmem:[%s0 + $0x2f8] sm:$0xff]
  %v148 = vld [vmem:[%s2] sm:$0xff]
  %v149 = vld [vmem:[%s2 + $0x8] sm:$0xff]
  %v150 = vld [vmem:[%s2 + $0x10] sm:$0xff]
  %v151 = vld [vmem:[%s2 + $0x18] sm:$0xff]
  %v152 = vld [vmem:[%s2 + $0x20] sm:$0xff]
  %v153 = vld [vmem:[%s2 + $0x28] sm:$0xff]
  %v154 = vld [vmem:[%s2 + $0x30] sm:$0xff]
  %v155 = vld [vmem:[%s2 + $0x38] sm:$0xff]
  %v156 = vld [vmem:[%s2 + $0x40] sm:$0xff]
  %v157 = vld [vmem:[%s2 + $0x48] sm:$0xff]
  %v158 = vld [vmem:[%s2 + $0x50] sm:$0xff]
  %v159 = vld [vmem:[%s2 + $0x58] sm:$0xff]
  %v160 = vld [vmem:[%s2 + $0x60] sm:$0xff]
  %v161 = vld [vmem:[%s2 + $0x68] sm:$0xff]
  %v162 = vld [vmem:[%s2 + $0x70] sm:$0xff]
  %v163 = vld [vmem:[%s2 + $0x78] sm:$0xff]
  %165 = vset.pattern.permute.xlu0 0
  %166 = vperm.xlu0 %165, %v148
  %v167 = vpop.permute.xlu0 %166
  %170 = vset.pattern.permute.xlu0 0
  %171 = vperm.xlu0 %170, %v149
  %v172 = vpop.permute.xlu0 %171
  %175 = vset.pattern.permute.xlu0 0
  %176 = vperm.xlu0 %175, %v150
  %v177 = vpop.permute.xlu0 %176
  %180 = vset.pattern.permute.xlu0 0
  %181 = vperm.xlu0 %180, %v151
  %v182 = vpop.permute.xlu0 %181
  %185 = vset.pattern.permute.xlu0 0
  %186 = vperm.xlu0 %185, %v152
  %v187 = vpop.permute.xlu0 %186
  %190 = vset.pattern.permute.xlu0 0
  %191 = vperm.xlu0 %190, %v153
  %v192 = vpop.permute.xlu0 %191
  %195 = vset.pattern.permute.xlu0 0
  %196 = vperm.xlu0 %195, %v154
  %v197 = vpop.permute.xlu0 %196
  %200 = vset.pattern.permute.xlu0 0
  %201 = vperm.xlu0 %200, %v155
  %v202 = vpop.permute.xlu0 %201
  %205 = vset.pattern.permute.xlu0 0
  %206 = vperm.xlu0 %205, %v156
  %v207 = vpop.permute.xlu0 %206
  %210 = vset.pattern.permute.xlu0 0
  %211 = vperm.xlu0 %210, %v157
  %v212 = vpop.permute.xlu0 %211
  %215 = vset.pattern.permute.xlu0 0
  %216 = vperm.xlu0 %215, %v158
  %v217 = vpop.permute.xlu0 %216
  %220 = vset.pattern.permute.xlu0 0
  %221 = vperm.xlu0 %220, %v159
  %v222 = vpop.permute.xlu0 %221
  %225 = vset.pattern.permute.xlu0 0
  %226 = vperm.xlu0 %225, %v160
  %v227 = vpop.permute.xlu0 %226
  %230 = vset.pattern.permute.xlu0 0
  %231 = vperm.xlu0 %230, %v161
  %v232 = vpop.permute.xlu0 %231
  %235 = vset.pattern.permute.xlu0 0
  %236 = vperm.xlu0 %235, %v162
  %v237 = vpop.permute.xlu0 %236
  %240 = vset.pattern.permute.xlu0 0
  %241 = vperm.xlu0 %240, %v163
  %v242 = vpop.permute.xlu0 %241
  %v276 = vunpack.c.l.b16 %v20
  %v277 = vunpack.c.h.b16 %v20
  %v278 = vunpack.c.l.b16 %v21
  %v279 = vunpack.c.l.b16 %v22
  %v280 = vunpack.c.h.b16 %v22
  %v281 = vunpack.c.l.b16 %v23
  %v282 = vunpack.c.l.b16 %v24
  %v283 = vunpack.c.h.b16 %v24
  %v284 = vunpack.c.l.b16 %v25
  %v285 = vunpack.c.l.b16 %v26
  %v286 = vunpack.c.h.b16 %v26
  %v287 = vunpack.c.l.b16 %v27
  %v288 = vunpack.c.l.b16 %v28
  %v289 = vunpack.c.h.b16 %v28
  %v290 = vunpack.c.l.b16 %v29
  %v291 = vunpack.c.l.b16 %v30
  %v292 = vunpack.c.h.b16 %v30
  %v293 = vunpack.c.l.b16 %v31
  %v294 = vunpack.c.l.b16 %v32
  %v295 = vunpack.c.h.b16 %v32
  %v296 = vunpack.c.l.b16 %v33
  %v297 = vunpack.c.l.b16 %v34
  %v298 = vunpack.c.h.b16 %v34
  %v299 = vunpack.c.l.b16 %v35
  %v300 = vunpack.c.l.b16 %v36
  %v301 = vunpack.c.h.b16 %v36
  %v302 = vunpack.c.l.b16 %v37
  %v303 = vunpack.c.l.b16 %v38
  %v304 = vunpack.c.h.b16 %v38
  %v305 = vunpack.c.l.b16 %v39
  %v306 = vunpack.c.l.b16 %v40
  %v307 = vunpack.c.h.b16 %v40
  %v308 = vunpack.c.l.b16 %v41
  %v309 = vunpack.c.l.b16 %v42
  %v310 = vunpack.c.h.b16 %v42
  %v311 = vunpack.c.l.b16 %v43
  %v312 = vunpack.c.l.b16 %v44
  %v313 = vunpack.c.h.b16 %v44
  %v314 = vunpack.c.l.b16 %v45
  %v315 = vunpack.c.l.b16 %v46
  %v316 = vunpack.c.h.b16 %v46
  %v317 = vunpack.c.l.b16 %v47
  %v318 = vunpack.c.l.b16 %v48
  %v319 = vunpack.c.h.b16 %v48
  %v320 = vunpack.c.l.b16 %v49
  %v321 = vunpack.c.l.b16 %v50
  %v322 = vunpack.c.h.b16 %v50
  %v323 = vunpack.c.l.b16 %v51
  %v324 = vpack.c.b16 %v279, %v276
  %v325 = vpack.c.b16 %v280, %v277
  %v326 = vpack.c.b16 %v281, %v278
  %v327 = vpack.c.b16 %v285, %v282
  %v328 = vpack.c.b16 %v286, %v283
  %v329 = vpack.c.b16 %v287, %v284
  %v330 = vpack.c.b16 %v291, %v288
  %v331 = vpack.c.b16 %v292, %v289
  %v332 = vpack.c.b16 %v293, %v290
  %v333 = vpack.c.b16 %v297, %v294
  %v334 = vpack.c.b16 %v298, %v295
  %v335 = vpack.c.b16 %v299, %v296
  %v336 = vpack.c.b16 %v303, %v300
  %v337 = vpack.c.b16 %v304, %v301
  %v338 = vpack.c.b16 %v305, %v302
  %v339 = vpack.c.b16 %v309, %v306
  %v340 = vpack.c.b16 %v310, %v307
  %v341 = vpack.c.b16 %v311, %v308
  %v342 = vpack.c.b16 %v315, %v312
  %v343 = vpack.c.b16 %v316, %v313
  %v344 = vpack.c.b16 %v317, %v314
  %v345 = vpack.c.b16 %v321, %v318
  %v346 = vpack.c.b16 %v322, %v319
  %v347 = vpack.c.b16 %v323, %v320
  %v468 = vunpack.c.l.b16 %v52
  %v469 = vunpack.c.h.b16 %v52
  %v470 = vunpack.c.l.b16 %v53
  %v471 = vunpack.c.h.b16 %v53
  %v472 = vunpack.c.l.b16 %v54
  %v473 = vunpack.c.h.b16 %v54
  %v474 = vunpack.c.l.b16 %v55
  %v475 = vunpack.c.h.b16 %v55
  %v476 = vunpack.c.l.b16 %v56
  %v477 = vunpack.c.h.b16 %v56
  %v478 = vunpack.c.l.b16 %v57
  %v479 = vunpack.c.h.b16 %v57
  %v480 = vunpack.c.l.b16 %v58
  %v481 = vunpack.c.h.b16 %v58
  %v482 = vunpack.c.l.b16 %v59
  %v483 = vunpack.c.h.b16 %v59
  %v484 = vunpack.c.l.b16 %v60
  %v485 = vunpack.c.h.b16 %v60
  %v486 = vunpack.c.l.b16 %v61
  %v487 = vunpack.c.h.b16 %v61
  %v488 = vunpack.c.l.b16 %v62
  %v489 = vunpack.c.h.b16 %v62
  %v490 = vunpack.c.l.b16 %v63
  %v491 = vunpack.c.h.b16 %v63
  %v492 = vunpack.c.l.b16 %v64
  %v493 = vunpack.c.h.b16 %v64
  %v494 = vunpack.c.l.b16 %v65
  %v495 = vunpack.c.h.b16 %v65
  %v496 = vunpack.c.l.b16 %v66
  %v497 = vunpack.c.h.b16 %v66
  %v498 = vunpack.c.l.b16 %v67
  %v499 = vunpack.c.h.b16 %v67
  %v500 = vunpack.c.l.b16 %v68
  %v501 = vunpack.c.h.b16 %v68
  %v502 = vunpack.c.l.b16 %v69
  %v503 = vunpack.c.h.b16 %v69
  %v504 = vunpack.c.l.b16 %v70
  %v505 = vunpack.c.h.b16 %v70
  %v506 = vunpack.c.l.b16 %v71
  %v507 = vunpack.c.h.b16 %v71
  %v508 = vunpack.c.l.b16 %v72
  %v509 = vunpack.c.h.b16 %v72
  %v510 = vunpack.c.l.b16 %v73
  %v511 = vunpack.c.h.b16 %v73
  %v512 = vunpack.c.l.b16 %v74
  %v513 = vunpack.c.h.b16 %v74
  %v514 = vunpack.c.l.b16 %v75
  %v515 = vunpack.c.h.b16 %v75
  %v516 = vunpack.c.l.b16 %v76
  %v517 = vunpack.c.h.b16 %v76
  %v518 = vunpack.c.l.b16 %v77
  %v519 = vunpack.c.h.b16 %v77
  %v520 = vunpack.c.l.b16 %v78
  %v521 = vunpack.c.h.b16 %v78
  %v522 = vunpack.c.l.b16 %v79
  %v523 = vunpack.c.h.b16 %v79
  %v524 = vunpack.c.l.b16 %v80
  %v525 = vunpack.c.h.b16 %v80
  %v526 = vunpack.c.l.b16 %v81
  %v527 = vunpack.c.h.b16 %v81
  %v528 = vunpack.c.l.b16 %v82
  %v529 = vunpack.c.h.b16 %v82
  %v530 = vunpack.c.l.b16 %v83
  %v531 = vunpack.c.h.b16 %v83
  %v532 = vunpack.c.l.b16 %v84
  %v533 = vunpack.c.h.b16 %v84
  %v534 = vunpack.c.l.b16 %v85
  %v535 = vunpack.c.h.b16 %v85
  %v536 = vunpack.c.l.b16 %v86
  %v537 = vunpack.c.h.b16 %v86
  %v538 = vunpack.c.l.b16 %v87
  %v539 = vunpack.c.h.b16 %v87
  %v540 = vunpack.c.l.b16 %v88
  %v541 = vunpack.c.h.b16 %v88
  %v542 = vunpack.c.l.b16 %v89
  %v543 = vunpack.c.h.b16 %v89
  %v544 = vunpack.c.l.b16 %v90
  %v545 = vunpack.c.h.b16 %v90
  %v546 = vunpack.c.l.b16 %v91
  %v547 = vunpack.c.h.b16 %v91
  %v548 = vunpack.c.l.b16 %v92
  %v549 = vunpack.c.h.b16 %v92
  %v550 = vunpack.c.l.b16 %v93
  %v551 = vunpack.c.h.b16 %v93
  %v552 = vunpack.c.l.b16 %v94
  %v553 = vunpack.c.h.b16 %v94
  %v554 = vunpack.c.l.b16 %v95
  %v555 = vunpack.c.h.b16 %v95
  %v556 = vunpack.c.l.b16 %v96
  %v557 = vunpack.c.h.b16 %v96
  %v558 = vunpack.c.l.b16 %v97
  %v559 = vunpack.c.h.b16 %v97
  %v560 = vunpack.c.l.b16 %v98
  %v561 = vunpack.c.h.b16 %v98
  %v562 = vunpack.c.l.b16 %v99
  %v563 = vunpack.c.h.b16 %v99
  %v564 = vunpack.c.l.b16 %v100
  %v565 = vunpack.c.h.b16 %v100
  %v566 = vunpack.c.l.b16 %v101
  %v567 = vunpack.c.h.b16 %v101
  %v568 = vunpack.c.l.b16 %v102
  %v569 = vunpack.c.h.b16 %v102
  %v570 = vunpack.c.l.b16 %v103
  %v571 = vunpack.c.h.b16 %v103
  %v572 = vunpack.c.l.b16 %v104
  %v573 = vunpack.c.h.b16 %v104
  %v574 = vunpack.c.l.b16 %v105
  %v575 = vunpack.c.h.b16 %v105
  %v576 = vunpack.c.l.b16 %v106
  %v577 = vunpack.c.h.b16 %v106
  %v578 = vunpack.c.l.b16 %v107
  %v579 = vunpack.c.h.b16 %v107
  %v580 = vunpack.c.l.b16 %v108
  %v581 = vunpack.c.h.b16 %v108
  %v582 = vunpack.c.l.b16 %v109
  %v583 = vunpack.c.h.b16 %v109
  %v584 = vunpack.c.l.b16 %v110
  %v585 = vunpack.c.h.b16 %v110
  %v586 = vunpack.c.l.b16 %v111
  %v587 = vunpack.c.h.b16 %v111
  %v588 = vunpack.c.l.b16 %v112
  %v589 = vunpack.c.h.b16 %v112
  %v590 = vunpack.c.l.b16 %v113
  %v591 = vunpack.c.h.b16 %v113
  %v592 = vunpack.c.l.b16 %v114
  %v593 = vunpack.c.h.b16 %v114
  %v594 = vunpack.c.l.b16 %v115
  %v595 = vunpack.c.h.b16 %v115
  %v596 = vunpack.c.l.b16 %v116
  %v597 = vunpack.c.h.b16 %v116
  %v598 = vunpack.c.l.b16 %v117
  %v599 = vunpack.c.h.b16 %v117
  %v600 = vunpack.c.l.b16 %v118
  %v601 = vunpack.c.h.b16 %v118
  %v602 = vunpack.c.l.b16 %v119
  %v603 = vunpack.c.h.b16 %v119
  %v604 = vunpack.c.l.b16 %v120
  %v605 = vunpack.c.h.b16 %v120
  %v606 = vunpack.c.l.b16 %v121
  %v607 = vunpack.c.h.b16 %v121
  %v608 = vunpack.c.l.b16 %v122
  %v609 = vunpack.c.h.b16 %v122
  %v610 = vunpack.c.l.b16 %v123
  %v611 = vunpack.c.h.b16 %v123
  %v612 = vunpack.c.l.b16 %v124
  %v613 = vunpack.c.h.b16 %v124
  %v614 = vunpack.c.l.b16 %v125
  %v615 = vunpack.c.h.b16 %v125
  %v616 = vunpack.c.l.b16 %v126
  %v617 = vunpack.c.h.b16 %v126
  %v618 = vunpack.c.l.b16 %v127
  %v619 = vunpack.c.h.b16 %v127
  %v620 = vunpack.c.l.b16 %v128
  %v621 = vunpack.c.h.b16 %v128
  %v622 = vunpack.c.l.b16 %v129
  %v623 = vunpack.c.h.b16 %v129
  %v624 = vunpack.c.l.b16 %v130
  %v625 = vunpack.c.h.b16 %v130
  %v626 = vunpack.c.l.b16 %v131
  %v627 = vunpack.c.h.b16 %v131
  %v628 = vunpack.c.l.b16 %v132
  %v629 = vunpack.c.h.b16 %v132
  %v630 = vunpack.c.l.b16 %v133
  %v631 = vunpack.c.h.b16 %v133
  %v632 = vunpack.c.l.b16 %v134
  %v633 = vunpack.c.h.b16 %v134
  %v634 = vunpack.c.l.b16 %v135
  %v635 = vunpack.c.h.b16 %v135
  %v636 = vunpack.c.l.b16 %v136
  %v637 = vunpack.c.h.b16 %v136
  %v638 = vunpack.c.l.b16 %v137
  %v639 = vunpack.c.h.b16 %v137
  %v640 = vunpack.c.l.b16 %v138
  %v641 = vunpack.c.h.b16 %v138
  %v642 = vunpack.c.l.b16 %v139
  %v643 = vunpack.c.h.b16 %v139
  %v644 = vunpack.c.l.b16 %v140
  %v645 = vunpack.c.h.b16 %v140
  %v646 = vunpack.c.l.b16 %v141
  %v647 = vunpack.c.h.b16 %v141
  %v648 = vunpack.c.l.b16 %v142
  %v649 = vunpack.c.h.b16 %v142
  %v650 = vunpack.c.l.b16 %v143
  %v651 = vunpack.c.h.b16 %v143
  %v652 = vunpack.c.l.b16 %v144
  %v653 = vunpack.c.h.b16 %v144
  %v654 = vunpack.c.l.b16 %v145
  %v655 = vunpack.c.h.b16 %v145
  %v656 = vunpack.c.l.b16 %v146
  %v657 = vunpack.c.h.b16 %v146
  %v658 = vunpack.c.l.b16 %v147
  %v659 = vunpack.c.h.b16 %v147
  %v660 = vpack.c.b16 %v472, %v468
  %v661 = vpack.c.b16 %v473, %v469
  %v662 = vpack.c.b16 %v474, %v470
  %v663 = vpack.c.b16 %v475, %v471
  %v664 = vpack.c.b16 %v480, %v476
  %v665 = vpack.c.b16 %v481, %v477
  %v666 = vpack.c.b16 %v482, %v478
  %v667 = vpack.c.b16 %v483, %v479
  %v668 = vpack.c.b16 %v488, %v484
  %v669 = vpack.c.b16 %v489, %v485
  %v670 = vpack.c.b16 %v490, %v486
  %v671 = vpack.c.b16 %v491, %v487
  %v672 = vpack.c.b16 %v496, %v492
  %v673 = vpack.c.b16 %v497, %v493
  %v674 = vpack.c.b16 %v498, %v494
  %v675 = vpack.c.b16 %v499, %v495
  %v676 = vpack.c.b16 %v504, %v500
  %v677 = vpack.c.b16 %v505, %v501
  %v678 = vpack.c.b16 %v506, %v502
  %v679 = vpack.c.b16 %v507, %v503
  %v680 = vpack.c.b16 %v512, %v508
  %v681 = vpack.c.b16 %v513, %v509
  %v682 = vpack.c.b16 %v514, %v510
  %v683 = vpack.c.b16 %v515, %v511
  %v684 = vpack.c.b16 %v520, %v516
  %v685 = vpack.c.b16 %v521, %v517
  %v686 = vpack.c.b16 %v522, %v518
  %v687 = vpack.c.b16 %v523, %v519
  %v688 = vpack.c.b16 %v528, %v524
  %v689 = vpack.c.b16 %v529, %v525
  %v690 = vpack.c.b16 %v530, %v526
  %v691 = vpack.c.b16 %v531, %v527
  %v692 = vpack.c.b16 %v536, %v532
  %v693 = vpack.c.b16 %v537, %v533
  %v694 = vpack.c.b16 %v538, %v534
  %v695 = vpack.c.b16 %v539, %v535
  %v696 = vpack.c.b16 %v544, %v540
  %v697 = vpack.c.b16 %v545, %v541
  %v698 = vpack.c.b16 %v546, %v542
  %v699 = vpack.c.b16 %v547, %v543
  %v700 = vpack.c.b16 %v552, %v548
  %v701 = vpack.c.b16 %v553, %v549
  %v702 = vpack.c.b16 %v554, %v550
  %v703 = vpack.c.b16 %v555, %v551
  %v704 = vpack.c.b16 %v560, %v556
  %v705 = vpack.c.b16 %v561, %v557
  %v706 = vpack.c.b16 %v562, %v558
  %v707 = vpack.c.b16 %v563, %v559
  %v708 = vpack.c.b16 %v568, %v564
  %v709 = vpack.c.b16 %v569, %v565
  %v710 = vpack.c.b16 %v570, %v566
  %v711 = vpack.c.b16 %v571, %v567
  %v712 = vpack.c.b16 %v576, %v572
  %v713 = vpack.c.b16 %v577, %v573
  %v714 = vpack.c.b16 %v578, %v574
  %v715 = vpack.c.b16 %v579, %v575
  %v716 = vpack.c.b16 %v584, %v580
  %v717 = vpack.c.b16 %v585, %v581
  %v718 = vpack.c.b16 %v586, %v582
  %v719 = vpack.c.b16 %v587, %v583
  %v720 = vpack.c.b16 %v592, %v588
  %v721 = vpack.c.b16 %v593, %v589
  %v722 = vpack.c.b16 %v594, %v590
  %v723 = vpack.c.b16 %v595, %v591
  %v724 = vpack.c.b16 %v600, %v596
  %v725 = vpack.c.b16 %v601, %v597
  %v726 = vpack.c.b16 %v602, %v598
  %v727 = vpack.c.b16 %v603, %v599
  %v728 = vpack.c.b16 %v608, %v604
  %v729 = vpack.c.b16 %v609, %v605
  %v730 = vpack.c.b16 %v610, %v606
  %v731 = vpack.c.b16 %v611, %v607
  %v732 = vpack.c.b16 %v616, %v612
  %v733 = vpack.c.b16 %v617, %v613
  %v734 = vpack.c.b16 %v618, %v614
  %v735 = vpack.c.b16 %v619, %v615
  %v736 = vpack.c.b16 %v624, %v620
  %v737 = vpack.c.b16 %v625, %v621
  %v738 = vpack.c.b16 %v626, %v622
  %v739 = vpack.c.b16 %v627, %v623
  %v740 = vpack.c.b16 %v632, %v628
  %v741 = vpack.c.b16 %v633, %v629
  %v742 = vpack.c.b16 %v634, %v630
  %v743 = vpack.c.b16 %v635, %v631
  %v744 = vpack.c.b16 %v640, %v636
  %v745 = vpack.c.b16 %v641, %v637
  %v746 = vpack.c.b16 %v642, %v638
  %v747 = vpack.c.b16 %v643, %v639
  %v748 = vpack.c.b16 %v648, %v644
  %v749 = vpack.c.b16 %v649, %v645
  %v750 = vpack.c.b16 %v650, %v646
  %v751 = vpack.c.b16 %v651, %v647
  %v752 = vpack.c.b16 %v656, %v652
  %v753 = vpack.c.b16 %v657, %v653
  %v754 = vpack.c.b16 %v658, %v654
  %v755 = vpack.c.b16 %v659, %v655
  %852 = vmatprep.subr.bf16.mxu0 %v689
  %853 = vmatpush1.bf16.msra.mxu0 %v688
  %854 = vmatprep.subr.bf16.mxu0 %v685
  %855 = vmatpush1.bf16.msra.mxu0 %v684
  %856 = vmatprep.subr.bf16.mxu0 %v681
  %857 = vmatpush1.bf16.msra.mxu0 %v680
  %858 = vmatprep.subr.bf16.mxu0 %v677
  %859 = vmatpush1.bf16.msra.mxu0 %v676
  %860 = vmatprep.subr.bf16.mxu0 %v673
  %861 = vmatpush1.bf16.msra.mxu0 %v672
  %862 = vmatprep.subr.bf16.mxu0 %v669
  %863 = vmatpush1.bf16.msra.mxu0 %v668
  %864 = vmatprep.subr.bf16.mxu0 %v665
  %865 = vmatpush1.bf16.msra.mxu0 %v664
  %866 = vmatprep.subr.bf16.mxu0 %v661
  %867 = vmatpush1.bf16.msra.mxu0 %v660
  %868 = vmatprep.subr.bf16.mxu0 %v721
  %869 = vmatpush2.bf16.msra.mxu0 %v720
  %870 = vmatprep.subr.bf16.mxu0 %v717
  %871 = vmatpush2.bf16.msra.mxu0 %v716
  %872 = vmatprep.subr.bf16.mxu0 %v713
  %873 = vmatpush2.bf16.msra.mxu0 %v712
  %874 = vmatprep.subr.bf16.mxu0 %v709
  %875 = vmatpush2.bf16.msra.mxu0 %v708
  %876 = vmatprep.subr.bf16.mxu0 %v705
  %877 = vmatpush2.bf16.msra.mxu0 %v704
  %878 = vmatprep.subr.bf16.mxu0 %v701
  %879 = vmatpush2.bf16.msra.mxu0 %v700
  %880 = vmatprep.subr.bf16.mxu0 %v697
  %881 = vmatpush2.bf16.msra.mxu0 %v696
  %882 = vmatprep.subr.bf16.mxu0 %v693
  %883 = vmatpush2.bf16.msra.mxu0 %v692
  %884 = vmatprep.mubr.bf16.mxu0 %v325
  %885 = vmatmul.mubr.bf16.gmra.mxu0 %v324
  %v886 = vpop.f32.mrf.mxu0
  %v887 = vadd.f32 %v167, %v886
  %v888 = vpop.f32.mrf.mxu0
  %v889 = vadd.f32 %v167, %v888
  %v890 = vpop.f32.mrf.mxu0
  %v891 = vadd.f32 %v172, %v890
  %v892 = vpop.f32.mrf.mxu0
  %v893 = vadd.f32 %v172, %v892
  %894 = vmatprep.mubr.bf16.mxu0 %v328
  %895 = vmatmul.mubr.bf16.gmra.mxu0 %v327
  %v896 = vpop.f32.mrf.mxu0
  %v897 = vadd.f32 %v177, %v896
  %v898 = vpop.f32.mrf.mxu0
  %v899 = vadd.f32 %v177, %v898
  %v900 = vpop.f32.mrf.mxu0
  %v901 = vadd.f32 %v182, %v900
  %v902 = vpop.f32.mrf.mxu0
  %v903 = vadd.f32 %v182, %v902
  %904 = vmatprep.mubr.bf16.mxu0 %v331
  %905 = vmatmul.mubr.bf16.gmra.mxu0 %v330
  %v906 = vpop.f32.mrf.mxu0
  %v907 = vadd.f32 %v187, %v906
  %v908 = vpop.f32.mrf.mxu0
  %v909 = vadd.f32 %v187, %v908
  %v910 = vpop.f32.mrf.mxu0
  %v911 = vadd.f32 %v192, %v910
  %v912 = vpop.f32.mrf.mxu0
  %v913 = vadd.f32 %v192, %v912
  %914 = vmatprep.mubr.bf16.mxu0 %v334
  %915 = vmatmul.mubr.bf16.gmra.mxu0 %v333
  %v916 = vpop.f32.mrf.mxu0
  %v917 = vadd.f32 %v197, %v916
  %v918 = vpop.f32.mrf.mxu0
  %v919 = vadd.f32 %v197, %v918
  %v920 = vpop.f32.mrf.mxu0
  %v921 = vadd.f32 %v202, %v920
  %v922 = vpop.f32.mrf.mxu0
  %v923 = vadd.f32 %v202, %v922
  %924 = vmatprep.mubr.bf16.mxu0 %v337
  %925 = vmatmul.mubr.bf16.gmra.mxu0 %v336
  %v926 = vpop.f32.mrf.mxu0
  %v927 = vadd.f32 %v207, %v926
  %v928 = vpop.f32.mrf.mxu0
  %v929 = vadd.f32 %v207, %v928
  %v930 = vpop.f32.mrf.mxu0
  %v931 = vadd.f32 %v212, %v930
  %v932 = vpop.f32.mrf.mxu0
  %v933 = vadd.f32 %v212, %v932
  %934 = vmatprep.mubr.bf16.mxu0 %v340
  %935 = vmatmul.mubr.bf16.gmra.mxu0 %v339
  %v936 = vpop.f32.mrf.mxu0
  %v937 = vadd.f32 %v217, %v936
  %v938 = vpop.f32.mrf.mxu0
  %v939 = vadd.f32 %v217, %v938
  %v940 = vpop.f32.mrf.mxu0
  %v941 = vadd.f32 %v222, %v940
  %v942 = vpop.f32.mrf.mxu0
  %v943 = vadd.f32 %v222, %v942
  %944 = vmatprep.mubr.bf16.mxu0 %v343
  %945 = vmatmul.mubr.bf16.gmra.mxu0 %v342
  %v946 = vpop.f32.mrf.mxu0
  %v947 = vadd.f32 %v227, %v946
  %v948 = vpop.f32.mrf.mxu0
  %v949 = vadd.f32 %v227, %v948
  %v950 = vpop.f32.mrf.mxu0
  %v951 = vadd.f32 %v232, %v950
  %v952 = vpop.f32.mrf.mxu0
  %v953 = vadd.f32 %v232, %v952
  %954 = vmatprep.mubr.bf16.mxu0 %v346
  %955 = vmatmul.mubr.bf16.gmra.mxu0 %v345
  %v956 = vpop.f32.mrf.mxu0
  %v957 = vadd.f32 %v237, %v956
  %v958 = vpop.f32.mrf.mxu0
  %v959 = vadd.f32 %v237, %v958
  %v960 = vpop.f32.mrf.mxu0
  %v961 = vadd.f32 %v242, %v960
  %v962 = vpop.f32.mrf.mxu0
  %v963 = vadd.f32 %v242, %v962
  %964 = vdwg.mxu0
  %965 = vmatprep.subr.bf16.mxu0 %v753
  %966 = vmatpush1.bf16.msra.mxu0 %v752
  %967 = vmatprep.subr.bf16.mxu0 %v749
  %968 = vmatpush1.bf16.msra.mxu0 %v748
  %969 = vmatprep.subr.bf16.mxu0 %v745
  %970 = vmatpush1.bf16.msra.mxu0 %v744
  %971 = vmatprep.subr.bf16.mxu0 %v741
  %972 = vmatpush1.bf16.msra.mxu0 %v740
  %973 = vmatprep.subr.bf16.mxu0 %v737
  %974 = vmatpush1.bf16.msra.mxu0 %v736
  %975 = vmatprep.subr.bf16.mxu0 %v733
  %976 = vmatpush1.bf16.msra.mxu0 %v732
  %977 = vmatprep.subr.bf16.mxu0 %v729
  %978 = vmatpush1.bf16.msra.mxu0 %v728
  %979 = vmatprep.subr.bf16.mxu0 %v725
  %980 = vmatpush1.bf16.msra.mxu0 %v724
  %981 = vmatprep.subr.bf16.mxu0 0
  %982 = vmatpush2.bf16.msra.mxu0 0
  %983 = vmatprep.subr.bf16.mxu0 0
  %984 = vmatpush2.bf16.msra.mxu0 0
  %985 = vmatprep.subr.bf16.mxu0 0
  %986 = vmatpush2.bf16.msra.mxu0 0
  %987 = vmatprep.subr.bf16.mxu0 0
  %988 = vmatpush2.bf16.msra.mxu0 0
  %989 = vmatprep.subr.bf16.mxu0 0
  %990 = vmatpush2.bf16.msra.mxu0 0
  %991 = vmatprep.subr.bf16.mxu0 0
  %992 = vmatpush2.bf16.msra.mxu0 0
  %993 = vmatprep.subr.bf16.mxu0 0
  %994 = vmatpush2.bf16.msra.mxu0 0
  %995 = vmatprep.subr.bf16.mxu0 0
  %996 = vmatpush2.bf16.msra.mxu0 0
  %997 = vmatprep.mubr.bf16.mxu0 0
  %998 = vmatmul.mubr.bf16.gmra.mxu0 %v326
  %v999 = vpop.f32.mrf.mxu0
  %v1000 = vadd.f32 %v887, %v999
  %v1001 = vpop.f32.mrf.mxu0
  %v1002 = vadd.f32 %v889, %v1001
  %v1003 = vpop.f32.mrf.mxu0
  %v1004 = vadd.f32 %v891, %v1003
  %v1005 = vpop.f32.mrf.mxu0
  %v1006 = vadd.f32 %v893, %v1005
  %1007 = vmatprep.mubr.bf16.mxu0 0
  %1008 = vmatmul.mubr.bf16.gmra.mxu0 %v329
  %v1009 = vpop.f32.mrf.mxu0
  %v1010 = vadd.f32 %v897, %v1009
  %v1011 = vpop.f32.mrf.mxu0
  %v1012 = vadd.f32 %v899, %v1011
  %v1013 = vpop.f32.mrf.mxu0
  %v1014 = vadd.f32 %v901, %v1013
  %v1015 = vpop.f32.mrf.mxu0
  %v1016 = vadd.f32 %v903, %v1015
  %1017 = vmatprep.mubr.bf16.mxu0 0
  %1018 = vmatmul.mubr.bf16.gmra.mxu0 %v332
  %v1019 = vpop.f32.mrf.mxu0
  %v1020 = vadd.f32 %v907, %v1019
  %v1021 = vpop.f32.mrf.mxu0
  %v1022 = vadd.f32 %v909, %v1021
  %v1023 = vpop.f32.mrf.mxu0
  %v1024 = vadd.f32 %v911, %v1023
  %v1025 = vpop.f32.mrf.mxu0
  %v1026 = vadd.f32 %v913, %v1025
  %1027 = vmatprep.mubr.bf16.mxu0 0
  %1028 = vmatmul.mubr.bf16.gmra.mxu0 %v335
  %v1029 = vpop.f32.mrf.mxu0
  %v1030 = vadd.f32 %v917, %v1029
  %v1031 = vpop.f32.mrf.mxu0
  %v1032 = vadd.f32 %v919, %v1031
  %v1033 = vpop.f32.mrf.mxu0
  %v1034 = vadd.f32 %v921, %v1033
  %v1035 = vpop.f32.mrf.mxu0
  %v1036 = vadd.f32 %v923, %v1035
  %1037 = vmatprep.mubr.bf16.mxu0 0
  %1038 = vmatmul.mubr.bf16.gmra.mxu0 %v338
  %v1039 = vpop.f32.mrf.mxu0
  %v1040 = vadd.f32 %v927, %v1039
  %v1041 = vpop.f32.mrf.mxu0
  %v1042 = vadd.f32 %v929, %v1041
  %v1043 = vpop.f32.mrf.mxu0
  %v1044 = vadd.f32 %v931, %v1043
  %v1045 = vpop.f32.mrf.mxu0
  %v1046 = vadd.f32 %v933, %v1045
  %1047 = vmatprep.mubr.bf16.mxu0 0
  %1048 = vmatmul.mubr.bf16.gmra.mxu0 %v341
  %v1049 = vpop.f32.mrf.mxu0
  %v1050 = vadd.f32 %v937, %v1049
  %v1051 = vpop.f32.mrf.mxu0
  %v1052 = vadd.f32 %v939, %v1051
  %v1053 = vpop.f32.mrf.mxu0
  %v1054 = vadd.f32 %v941, %v1053
  %v1055 = vpop.f32.mrf.mxu0
  %v1056 = vadd.f32 %v943, %v1055
  %1057 = vmatprep.mubr.bf16.mxu0 0
  %1058 = vmatmul.mubr.bf16.gmra.mxu0 %v344
  %v1059 = vpop.f32.mrf.mxu0
  %v1060 = vadd.f32 %v947, %v1059
  %v1061 = vpop.f32.mrf.mxu0
  %v1062 = vadd.f32 %v949, %v1061
  %v1063 = vpop.f32.mrf.mxu0
  %v1064 = vadd.f32 %v951, %v1063
  %v1065 = vpop.f32.mrf.mxu0
  %v1066 = vadd.f32 %v953, %v1065
  %1067 = vmatprep.mubr.bf16.mxu0 0
  %1068 = vmatmul.mubr.bf16.gmra.mxu0 %v347
  %v1069 = vpop.f32.mrf.mxu0
  %v1070 = vadd.f32 %v957, %v1069
  %v1071 = vpop.f32.mrf.mxu0
  %v1072 = vadd.f32 %v959, %v1071
  %v1073 = vpop.f32.mrf.mxu0
  %v1074 = vadd.f32 %v961, %v1073
  %v1075 = vpop.f32.mrf.mxu0
  %v1076 = vadd.f32 %v963, %v1075
  %1077 = vdwg.mxu0
  %1078 = vmatprep.subr.bf16.mxu0 %v691
  %1079 = vmatpush1.bf16.msra.mxu0 %v690
  %1080 = vmatprep.subr.bf16.mxu0 %v687
  %1081 = vmatpush1.bf16.msra.mxu0 %v686
  %1082 = vmatprep.subr.bf16.mxu0 %v683
  %1083 = vmatpush1.bf16.msra.mxu0 %v682
  %1084 = vmatprep.subr.bf16.mxu0 %v679
  %1085 = vmatpush1.bf16.msra.mxu0 %v678
  %1086 = vmatprep.subr.bf16.mxu0 %v675
  %1087 = vmatpush1.bf16.msra.mxu0 %v674
  %1088 = vmatprep.subr.bf16.mxu0 %v671
  %1089 = vmatpush1.bf16.msra.mxu0 %v670
  %1090 = vmatprep.subr.bf16.mxu0 %v667
  %1091 = vmatpush1.bf16.msra.mxu0 %v666
  %1092 = vmatprep.subr.bf16.mxu0 %v663
  %1093 = vmatpush1.bf16.msra.mxu0 %v662
  %1094 = vmatprep.subr.bf16.mxu0 %v723
  %1095 = vmatpush2.bf16.msra.mxu0 %v722
  %1096 = vmatprep.subr.bf16.mxu0 %v719
  %1097 = vmatpush2.bf16.msra.mxu0 %v718
  %1098 = vmatprep.subr.bf16.mxu0 %v715
  %1099 = vmatpush2.bf16.msra.mxu0 %v714
  %1100 = vmatprep.subr.bf16.mxu0 %v711
  %1101 = vmatpush2.bf16.msra.mxu0 %v710
  %1102 = vmatprep.subr.bf16.mxu0 %v707
  %1103 = vmatpush2.bf16.msra.mxu0 %v706
  %1104 = vmatprep.subr.bf16.mxu0 %v703
  %1105 = vmatpush2.bf16.msra.mxu0 %v702
  %1106 = vmatprep.subr.bf16.mxu0 %v699
  %1107 = vmatpush2.bf16.msra.mxu0 %v698
  %1108 = vmatprep.subr.bf16.mxu0 %v695
  %1109 = vmatpush2.bf16.msra.mxu0 %v694
  %1110 = vmatprep.mubr.bf16.mxu0 %v325
  %1111 = vmatmul.mubr.bf16.gmra.mxu0 %v324
  %v1112 = vpop.f32.mrf.mxu0
  %v1113 = vadd.f32 %v167, %v1112
  %v1114 = vpop.f32.mrf.mxu0
  %v1115 = vadd.f32 %v167, %v1114
  %v1116 = vpop.f32.mrf.mxu0
  %v1117 = vadd.f32 %v172, %v1116
  %v1118 = vpop.f32.mrf.mxu0
  %v1119 = vadd.f32 %v172, %v1118
  %1120 = vmatprep.mubr.bf16.mxu0 %v328
  %1121 = vmatmul.mubr.bf16.gmra.mxu0 %v327
  %v1122 = vpop.f32.mrf.mxu0
  %v1123 = vadd.f32 %v177, %v1122
  %v1124 = vpop.f32.mrf.mxu0
  %v1125 = vadd.f32 %v177, %v1124
  %v1126 = vpop.f32.mrf.mxu0
  %v1127 = vadd.f32 %v182, %v1126
  %v1128 = vpop.f32.mrf.mxu0
  %v1129 = vadd.f32 %v182, %v1128
  %1130 = vmatprep.mubr.bf16.mxu0 %v331
  %1131 = vmatmul.mubr.bf16.gmra.mxu0 %v330
  %v1132 = vpop.f32.mrf.mxu0
  %v1133 = vadd.f32 %v187, %v1132
  %v1134 = vpop.f32.mrf.mxu0
  %v1135 = vadd.f32 %v187, %v1134
  %v1136 = vpop.f32.mrf.mxu0
  %v1137 = vadd.f32 %v192, %v1136
  %v1138 = vpop.f32.mrf.mxu0
  %v1139 = vadd.f32 %v192, %v1138
  %1140 = vmatprep.mubr.bf16.mxu0 %v334
  %1141 = vmatmul.mubr.bf16.gmra.mxu0 %v333
  %v1142 = vpop.f32.mrf.mxu0
  %v1143 = vadd.f32 %v197, %v1142
  %v1144 = vpop.f32.mrf.mxu0
  %v1145 = vadd.f32 %v197, %v1144
  %v1146 = vpop.f32.mrf.mxu0
  %v1147 = vadd.f32 %v202, %v1146
  %v1148 = vpop.f32.mrf.mxu0
  %v1149 = vadd.f32 %v202, %v1148
  %1150 = vmatprep.mubr.bf16.mxu0 %v337
  %1151 = vmatmul.mubr.bf16.gmra.mxu0 %v336
  %v1152 = vpop.f32.mrf.mxu0
  %v1153 = vadd.f32 %v207, %v1152
  %v1154 = vpop.f32.mrf.mxu0
  %v1155 = vadd.f32 %v207, %v1154
  %v1156 = vpop.f32.mrf.mxu0
  %v1157 = vadd.f32 %v212, %v1156
  %v1158 = vpop.f32.mrf.mxu0
  %v1159 = vadd.f32 %v212, %v1158
  %1160 = vmatprep.mubr.bf16.mxu0 %v340
  %1161 = vmatmul.mubr.bf16.gmra.mxu0 %v339
  %v1162 = vpop.f32.mrf.mxu0
  %v1163 = vadd.f32 %v217, %v1162
  %v1164 = vpop.f32.mrf.mxu0
  %v1165 = vadd.f32 %v217, %v1164
  %v1166 = vpop.f32.mrf.mxu0
  %v1167 = vadd.f32 %v222, %v1166
  %v1168 = vpop.f32.mrf.mxu0
  %v1169 = vadd.f32 %v222, %v1168
  %1170 = vmatprep.mubr.bf16.mxu0 %v343
  %1171 = vmatmul.mubr.bf16.gmra.mxu0 %v342
  %v1172 = vpop.f32.mrf.mxu0
  %v1173 = vadd.f32 %v227, %v1172
  %v1174 = vpop.f32.mrf.mxu0
  %v1175 = vadd.f32 %v227, %v1174
  %v1176 = vpop.f32.mrf.mxu0
  %v1177 = vadd.f32 %v232, %v1176
  %v1178 = vpop.f32.mrf.mxu0
  %v1179 = vadd.f32 %v232, %v1178
  %1180 = vmatprep.mubr.bf16.mxu0 %v346
  %1181 = vmatmul.mubr.bf16.gmra.mxu0 %v345
  %v1182 = vpop.f32.mrf.mxu0
  %v1183 = vadd.f32 %v237, %v1182
  %v1184 = vpop.f32.mrf.mxu0
  %v1185 = vadd.f32 %v237, %v1184
  %v1186 = vpop.f32.mrf.mxu0
  %v1187 = vadd.f32 %v242, %v1186
  %v1188 = vpop.f32.mrf.mxu0
  %v1189 = vadd.f32 %v242, %v1188
  %1190 = vdwg.mxu0
  %1191 = vmatprep.subr.bf16.mxu0 %v755
  %1192 = vmatpush1.bf16.msra.mxu0 %v754
  %1193 = vmatprep.subr.bf16.mxu0 %v751
  %1194 = vmatpush1.bf16.msra.mxu0 %v750
  %1195 = vmatprep.subr.bf16.mxu0 %v747
  %1196 = vmatpush1.bf16.msra.mxu0 %v746
  %1197 = vmatprep.subr.bf16.mxu0 %v743
  %1198 = vmatpush1.bf16.msra.mxu0 %v742
  %1199 = vmatprep.subr.bf16.mxu0 %v739
  %1200 = vmatpush1.bf16.msra.mxu0 %v738
  %1201 = vmatprep.subr.bf16.mxu0 %v735
  %1202 = vmatpush1.bf16.msra.mxu0 %v734
  %1203 = vmatprep.subr.bf16.mxu0 %v731
  %1204 = vmatpush1.bf16.msra.mxu0 %v730
  %1205 = vmatprep.subr.bf16.mxu0 %v727
  %1206 = vmatpush1.bf16.msra.mxu0 %v726
  %1207 = vmatprep.subr.bf16.mxu0 0
  %1208 = vmatpush2.bf16.msra.mxu0 0
  %1209 = vmatprep.subr.bf16.mxu0 0
  %1210 = vmatpush2.bf16.msra.mxu0 0
  %1211 = vmatprep.subr.bf16.mxu0 0
  %1212 = vmatpush2.bf16.msra.mxu0 0
  %1213 = vmatprep.subr.bf16.mxu0 0
  %1214 = vmatpush2.bf16.msra.mxu0 0
  %1215 = vmatprep.subr.bf16.mxu0 0
  %1216 = vmatpush2.bf16.msra.mxu0 0
  %1217 = vmatprep.subr.bf16.mxu0 0
  %1218 = vmatpush2.bf16.msra.mxu0 0
  %1219 = vmatprep.subr.bf16.mxu0 0
  %1220 = vmatpush2.bf16.msra.mxu0 0
  %1221 = vmatprep.subr.bf16.mxu0 0
  %1222 = vmatpush2.bf16.msra.mxu0 0
  %1223 = vmatprep.mubr.bf16.mxu0 0
  %1224 = vmatmul.mubr.bf16.gmra.mxu0 %v326
  %v1225 = vpop.f32.mrf.mxu0
  %v1226 = vadd.f32 %v1113, %v1225
  %v1227 = vpop.f32.mrf.mxu0
  %v1228 = vadd.f32 %v1115, %v1227
  %v1229 = vpop.f32.mrf.mxu0
  %v1230 = vadd.f32 %v1117, %v1229
  %v1231 = vpop.f32.mrf.mxu0
  %v1232 = vadd.f32 %v1119, %v1231
  %1233 = vmatprep.mubr.bf16.mxu0 0
  %1234 = vmatmul.mubr.bf16.gmra.mxu0 %v329
  %v1235 = vpop.f32.mrf.mxu0
  %v1236 = vadd.f32 %v1123, %v1235
  %v1237 = vpop.f32.mrf.mxu0
  %v1238 = vadd.f32 %v1125, %v1237
  %v1239 = vpop.f32.mrf.mxu0
  %v1240 = vadd.f32 %v1127, %v1239
  %v1241 = vpop.f32.mrf.mxu0
  %v1242 = vadd.f32 %v1129, %v1241
  %1243 = vmatprep.mubr.bf16.mxu0 0
  %1244 = vmatmul.mubr.bf16.gmra.mxu0 %v332
  %v1245 = vpop.f32.mrf.mxu0
  %v1246 = vadd.f32 %v1133, %v1245
  %v1247 = vpop.f32.mrf.mxu0
  %v1248 = vadd.f32 %v1135, %v1247
  %v1249 = vpop.f32.mrf.mxu0
  %v1250 = vadd.f32 %v1137, %v1249
  %v1251 = vpop.f32.mrf.mxu0
  %v1252 = vadd.f32 %v1139, %v1251
  %1253 = vmatprep.mubr.bf16.mxu0 0
  %1254 = vmatmul.mubr.bf16.gmra.mxu0 %v335
  %v1255 = vpop.f32.mrf.mxu0
  %v1256 = vadd.f32 %v1143, %v1255
  %v1257 = vpop.f32.mrf.mxu0
  %v1258 = vadd.f32 %v1145, %v1257
  %v1259 = vpop.f32.mrf.mxu0
  %v1260 = vadd.f32 %v1147, %v1259
  %v1261 = vpop.f32.mrf.mxu0
  %v1262 = vadd.f32 %v1149, %v1261
  %1263 = vmatprep.mubr.bf16.mxu0 0
  %1264 = vmatmul.mubr.bf16.gmra.mxu0 %v338
  %v1265 = vpop.f32.mrf.mxu0
  %v1266 = vadd.f32 %v1153, %v1265
  %v1267 = vpop.f32.mrf.mxu0
  %v1268 = vadd.f32 %v1155, %v1267
  %v1269 = vpop.f32.mrf.mxu0
  %v1270 = vadd.f32 %v1157, %v1269
  %v1271 = vpop.f32.mrf.mxu0
  %v1272 = vadd.f32 %v1159, %v1271
  %1273 = vmatprep.mubr.bf16.mxu0 0
  %1274 = vmatmul.mubr.bf16.gmra.mxu0 %v341
  %v1275 = vpop.f32.mrf.mxu0
  %v1276 = vadd.f32 %v1163, %v1275
  %v1277 = vpop.f32.mrf.mxu0
  %v1278 = vadd.f32 %v1165, %v1277
  %v1279 = vpop.f32.mrf.mxu0
  %v1280 = vadd.f32 %v1167, %v1279
  %v1281 = vpop.f32.mrf.mxu0
  %v1282 = vadd.f32 %v1169, %v1281
  %1283 = vmatprep.mubr.bf16.mxu0 0
  %1284 = vmatmul.mubr.bf16.gmra.mxu0 %v344
  %v1285 = vpop.f32.mrf.mxu0
  %v1286 = vadd.f32 %v1173, %v1285
  %v1287 = vpop.f32.mrf.mxu0
  %v1288 = vadd.f32 %v1175, %v1287
  %v1289 = vpop.f32.mrf.mxu0
  %v1290 = vadd.f32 %v1177, %v1289
  %v1291 = vpop.f32.mrf.mxu0
  %v1292 = vadd.f32 %v1179, %v1291
  %1293 = vmatprep.mubr.bf16.mxu0 0
  %1294 = vmatmul.mubr.bf16.gmra.mxu0 %v347
  %v1295 = vpop.f32.mrf.mxu0
  %v1296 = vadd.f32 %v1183, %v1295
  %v1297 = vpop.f32.mrf.mxu0
  %v1298 = vadd.f32 %v1185, %v1297
  %v1299 = vpop.f32.mrf.mxu0
  %v1300 = vadd.f32 %v1187, %v1299
  %v1301 = vpop.f32.mrf.mxu0
  %v1302 = vadd.f32 %v1189, %v1301
  %1303 = vdwg.mxu0
  %v1304 = vlaneseq
  %v1305 = vshrl.u32 %v1304, 7
  %v1306 = vadd.s32 %v1305, 8
  %v1307 = vadd.s32 %v1305, 16
  %v1308 = vadd.s32 %v1305, 24
  %v1309 = vadd.s32 %v1305, 32
  %v1310 = vadd.s32 %v1305, 40
  %v1311 = vadd.s32 %v1305, 48
  %v1312 = vadd.s32 %v1305, 56
  %v1313 = vadd.s32 %v1305, 64
  %v1314 = vadd.s32 %v1305, 72
  %v1315 = vadd.s32 %v1305, 80
  %v1316 = vadd.s32 %v1305, 88
  %v1317 = vadd.s32 %v1305, 96
  %v1318 = vadd.s32 %v1305, 104
  %v1319 = vadd.s32 %v1305, 112
  %v1320 = vadd.s32 %v1305, 120
  %vm1321 = vcmp.lt.s32.totalorder %v1305, 96
  %vm1322 = vcmp.lt.s32.totalorder %v1306, 96
  %vm1323 = vcmp.lt.s32.totalorder %v1307, 96
  %vm1324 = vcmp.lt.s32.totalorder %v1308, 96
  %vm1325 = vcmp.lt.s32.totalorder %v1309, 96
  %vm1326 = vcmp.lt.s32.totalorder %v1310, 96
  %vm1327 = vcmp.lt.s32.totalorder %v1311, 96
  %vm1328 = vcmp.lt.s32.totalorder %v1312, 96
  %vm1329 = vcmp.lt.s32.totalorder %v1313, 96
  %vm1330 = vcmp.lt.s32.totalorder %v1314, 96
  %vm1331 = vcmp.lt.s32.totalorder %v1315, 96
  %vm1332 = vcmp.lt.s32.totalorder %v1316, 96
  %vm1333 = vcmp.lt.s32.totalorder %v1317, 96
  %vm1334 = vcmp.lt.s32.totalorder %v1318, 96
  %vm1335 = vcmp.lt.s32.totalorder %v1319, 96
  %vm1336 = vcmp.lt.s32.totalorder %v1320, 96
  %v1337 = vmul.f32 %v1000, 0.5
  %v1338 = vmul.f32 %v1002, 0.5
  %v1339 = vmul.f32 %v1226, 0.5
  %v1340 = vmul.f32 %v1228, 0.5
  %v1341 = vmul.f32 %v1004, 0.5
  %v1342 = vmul.f32 %v1006, 0.5
  %v1343 = vmul.f32 %v1230, 0.5
  %v1344 = vmul.f32 %v1232, 0.5
  %v1345 = vmul.f32 %v1010, 0.5
  %v1346 = vmul.f32 %v1012, 0.5
  %v1347 = vmul.f32 %v1236, 0.5
  %v1348 = vmul.f32 %v1238, 0.5
  %v1349 = vmul.f32 %v1014, 0.5
  %v1350 = vmul.f32 %v1016, 0.5
  %v1351 = vmul.f32 %v1240, 0.5
  %v1352 = vmul.f32 %v1242, 0.5
  %v1353 = vmul.f32 %v1020, 0.5
  %v1354 = vmul.f32 %v1022, 0.5
  %v1355 = vmul.f32 %v1246, 0.5
  %v1356 = vmul.f32 %v1248, 0.5
  %v1357 = vmul.f32 %v1024, 0.5
  %v1358 = vmul.f32 %v1026, 0.5
  %v1359 = vmul.f32 %v1250, 0.5
  %v1360 = vmul.f32 %v1252, 0.5
  %v1361 = vmul.f32 %v1030, 0.5
  %v1362 = vmul.f32 %v1032, 0.5
  %v1363 = vmul.f32 %v1256, 0.5
  %v1364 = vmul.f32 %v1258, 0.5
  %v1365 = vmul.f32 %v1034, 0.5
  %v1366 = vmul.f32 %v1036, 0.5
  %v1367 = vmul.f32 %v1260, 0.5
  %v1368 = vmul.f32 %v1262, 0.5
  %v1369 = vmul.f32 %v1040, 0.5
  %v1370 = vmul.f32 %v1042, 0.5
  %v1371 = vmul.f32 %v1266, 0.5
  %v1372 = vmul.f32 %v1268, 0.5
  %v1373 = vmul.f32 %v1044, 0.5
  %v1374 = vmul.f32 %v1046, 0.5
  %v1375 = vmul.f32 %v1270, 0.5
  %v1376 = vmul.f32 %v1272, 0.5
  %v1377 = vmul.f32 %v1050, 0.5
  %v1378 = vmul.f32 %v1052, 0.5
  %v1379 = vmul.f32 %v1276, 0.5
  %v1380 = vmul.f32 %v1278, 0.5
  %v1381 = vmul.f32 %v1054, 0.5
  %v1382 = vmul.f32 %v1056, 0.5
  %v1383 = vmul.f32 %v1280, 0.5
  %v1384 = vmul.f32 %v1282, 0.5
  %v1385 = vmul.f32 %v1060, 0.5
  %v1386 = vmul.f32 %v1062, 0.5
  %v1387 = vmul.f32 %v1286, 0.5
  %v1388 = vmul.f32 %v1288, 0.5
  %v1389 = vmul.f32 %v1064, 0.5
  %v1390 = vmul.f32 %v1066, 0.5
  %v1391 = vmul.f32 %v1290, 0.5
  %v1392 = vmul.f32 %v1292, 0.5
  %v1393 = vmul.f32 %v1070, 0.5
  %v1394 = vmul.f32 %v1072, 0.5
  %v1395 = vmul.f32 %v1296, 0.5
  %v1396 = vmul.f32 %v1298, 0.5
  %v1397 = vmul.f32 %v1074, 0.5
  %v1398 = vmul.f32 %v1076, 0.5
  %v1399 = vmul.f32 %v1300, 0.5
  %v1400 = vmul.f32 %v1302, 0.5
  %v1401 = vsel %vm1321, %v1337, %v1000
  %v1402 = vsel %vm1321, %v1338, %v1002
  %v1403 = vsel %vm1321, %v1339, %v1226
  %v1404 = vsel %vm1321, %v1340, %v1228
  %v1405 = vsel %vm1322, %v1341, %v1004
  %v1406 = vsel %vm1322, %v1342, %v1006
  %v1407 = vsel %vm1322, %v1343, %v1230
  %v1408 = vsel %vm1322, %v1344, %v1232
  %v1409 = vsel %vm1323, %v1345, %v1010
  %v1410 = vsel %vm1323, %v1346, %v1012
  %v1411 = vsel %vm1323, %v1347, %v1236
  %v1412 = vsel %vm1323, %v1348, %v1238
  %v1413 = vsel %vm1324, %v1349, %v1014
  %v1414 = vsel %vm1324, %v1350, %v1016
  %v1415 = vsel %vm1324, %v1351, %v1240
  %v1416 = vsel %vm1324, %v1352, %v1242
  %v1417 = vsel %vm1325, %v1353, %v1020
  %v1418 = vsel %vm1325, %v1354, %v1022
  %v1419 = vsel %vm1325, %v1355, %v1246
  %v1420 = vsel %vm1325, %v1356, %v1248
  %v1421 = vsel %vm1326, %v1357, %v1024
  %v1422 = vsel %vm1326, %v1358, %v1026
  %v1423 = vsel %vm1326, %v1359, %v1250
  %v1424 = vsel %vm1326, %v1360, %v1252
  %v1425 = vsel %vm1327, %v1361, %v1030
  %v1426 = vsel %vm1327, %v1362, %v1032
  %v1427 = vsel %vm1327, %v1363, %v1256
  %v1428 = vsel %vm1327, %v1364, %v1258
  %v1429 = vsel %vm1328, %v1365, %v1034
  %v1430 = vsel %vm1328, %v1366, %v1036
  %v1431 = vsel %vm1328, %v1367, %v1260
  %v1432 = vsel %vm1328, %v1368, %v1262
  %v1433 = vsel %vm1329, %v1369, %v1040
  %v1434 = vsel %vm1329, %v1370, %v1042
  %v1435 = vsel %vm1329, %v1371, %v1266
  %v1436 = vsel %vm1329, %v1372, %v1268
  %v1437 = vsel %vm1330, %v1373, %v1044
  %v1438 = vsel %vm1330, %v1374, %v1046
  %v1439 = vsel %vm1330, %v1375, %v1270
  %v1440 = vsel %vm1330, %v1376, %v1272
  %v1441 = vsel %vm1331, %v1377, %v1050
  %v1442 = vsel %vm1331, %v1378, %v1052
  %v1443 = vsel %vm1331, %v1379, %v1276
  %v1444 = vsel %vm1331, %v1380, %v1278
  %v1445 = vsel %vm1332, %v1381, %v1054
  %v1446 = vsel %vm1332, %v1382, %v1056
  %v1447 = vsel %vm1332, %v1383, %v1280
  %v1448 = vsel %vm1332, %v1384, %v1282
  %v1449 = vsel %vm1333, %v1385, %v1060
  %v1450 = vsel %vm1333, %v1386, %v1062
  %v1451 = vsel %vm1333, %v1387, %v1286
  %v1452 = vsel %vm1333, %v1388, %v1288
  %v1453 = vsel %vm1334, %v1389, %v1064
  %v1454 = vsel %vm1334, %v1390, %v1066
  %v1455 = vsel %vm1334, %v1391, %v1290
  %v1456 = vsel %vm1334, %v1392, %v1292
  %v1457 = vsel %vm1335, %v1393, %v1070
  %v1458 = vsel %vm1335, %v1394, %v1072
  %v1459 = vsel %vm1335, %v1395, %v1296
  %v1460 = vsel %vm1335, %v1396, %v1298
  %v1461 = vsel %vm1336, %v1397, %v1074
  %v1462 = vsel %vm1336, %v1398, %v1076
  %v1463 = vsel %vm1336, %v1399, %v1300
  %v1464 = vsel %vm1336, %v1400, %v1302
  %v1465 = vtanh.pop %v1401
  %v1466 = vtanh.pop %v1402
  %v1467 = vtanh.pop %v1403
  %v1468 = vtanh.pop %v1404
  %v1469 = vtanh.pop %v1405
  %v1470 = vtanh.pop %v1406
  %v1471 = vtanh.pop %v1407
  %v1472 = vtanh.pop %v1408
  %v1473 = vtanh.pop %v1409
  %v1474 = vtanh.pop %v1410
  %v1475 = vtanh.pop %v1411
  %v1476 = vtanh.pop %v1412
  %v1477 = vtanh.pop %v1413
  %v1478 = vtanh.pop %v1414
  %v1479 = vtanh.pop %v1415
  %v1480 = vtanh.pop %v1416
  %v1481 = vtanh.pop %v1417
  %v1482 = vtanh.pop %v1418
  %v1483 = vtanh.pop %v1419
  %v1484 = vtanh.pop %v1420
  %v1485 = vtanh.pop %v1421
  %v1486 = vtanh.pop %v1422
  %v1487 = vtanh.pop %v1423
  %v1488 = vtanh.pop %v1424
  %v1489 = vtanh.pop %v1425
  %v1490 = vtanh.pop %v1426
  %v1491 = vtanh.pop %v1427
  %v1492 = vtanh.pop %v1428
  %v1493 = vtanh.pop %v1429
  %v1494 = vtanh.pop %v1430
  %v1495 = vtanh.pop %v1431
  %v1496 = vtanh.pop %v1432
  %v1497 = vtanh.pop %v1433
  %v1498 = vtanh.pop %v1434
  %v1499 = vtanh.pop %v1435
  %v1500 = vtanh.pop %v1436
  %v1501 = vtanh.pop %v1437
  %v1502 = vtanh.pop %v1438
  %v1503 = vtanh.pop %v1439
  %v1504 = vtanh.pop %v1440
  %v1505 = vtanh.pop %v1441
  %v1506 = vtanh.pop %v1442
  %v1507 = vtanh.pop %v1443
  %v1508 = vtanh.pop %v1444
  %v1509 = vtanh.pop %v1445
  %v1510 = vtanh.pop %v1446
  %v1511 = vtanh.pop %v1447
  %v1512 = vtanh.pop %v1448
  %v1513 = vtanh.pop %v1449
  %v1514 = vtanh.pop %v1450
  %v1515 = vtanh.pop %v1451
  %v1516 = vtanh.pop %v1452
  %v1517 = vtanh.pop %v1453
  %v1518 = vtanh.pop %v1454
  %v1519 = vtanh.pop %v1455
  %v1520 = vtanh.pop %v1456
  %v1521 = vtanh.pop %v1457
  %v1522 = vtanh.pop %v1458
  %v1523 = vtanh.pop %v1459
  %v1524 = vtanh.pop %v1460
  %v1525 = vtanh.pop %v1461
  %v1526 = vtanh.pop %v1462
  %v1527 = vtanh.pop %v1463
  %v1528 = vtanh.pop %v1464
  %v1529 = vadd.f32 %v1465, 1.0
  %v1530 = vadd.f32 %v1466, 1.0
  %v1531 = vadd.f32 %v1467, 1.0
  %v1532 = vadd.f32 %v1468, 1.0
  %v1533 = vadd.f32 %v1469, 1.0
  %v1534 = vadd.f32 %v1470, 1.0
  %v1535 = vadd.f32 %v1471, 1.0
  %v1536 = vadd.f32 %v1472, 1.0
  %v1537 = vadd.f32 %v1473, 1.0
  %v1538 = vadd.f32 %v1474, 1.0
  %v1539 = vadd.f32 %v1475, 1.0
  %v1540 = vadd.f32 %v1476, 1.0
  %v1541 = vadd.f32 %v1477, 1.0
  %v1542 = vadd.f32 %v1478, 1.0
  %v1543 = vadd.f32 %v1479, 1.0
  %v1544 = vadd.f32 %v1480, 1.0
  %v1545 = vadd.f32 %v1481, 1.0
  %v1546 = vadd.f32 %v1482, 1.0
  %v1547 = vadd.f32 %v1483, 1.0
  %v1548 = vadd.f32 %v1484, 1.0
  %v1549 = vadd.f32 %v1485, 1.0
  %v1550 = vadd.f32 %v1486, 1.0
  %v1551 = vadd.f32 %v1487, 1.0
  %v1552 = vadd.f32 %v1488, 1.0
  %v1553 = vadd.f32 %v1489, 1.0
  %v1554 = vadd.f32 %v1490, 1.0
  %v1555 = vadd.f32 %v1491, 1.0
  %v1556 = vadd.f32 %v1492, 1.0
  %v1557 = vadd.f32 %v1493, 1.0
  %v1558 = vadd.f32 %v1494, 1.0
  %v1559 = vadd.f32 %v1495, 1.0
  %v1560 = vadd.f32 %v1496, 1.0
  %v1561 = vadd.f32 %v1497, 1.0
  %v1562 = vadd.f32 %v1498, 1.0
  %v1563 = vadd.f32 %v1499, 1.0
  %v1564 = vadd.f32 %v1500, 1.0
  %v1565 = vadd.f32 %v1501, 1.0
  %v1566 = vadd.f32 %v1502, 1.0
  %v1567 = vadd.f32 %v1503, 1.0
  %v1568 = vadd.f32 %v1504, 1.0
  %v1569 = vadd.f32 %v1505, 1.0
  %v1570 = vadd.f32 %v1506, 1.0
  %v1571 = vadd.f32 %v1507, 1.0
  %v1572 = vadd.f32 %v1508, 1.0
  %v1573 = vadd.f32 %v1509, 1.0
  %v1574 = vadd.f32 %v1510, 1.0
  %v1575 = vadd.f32 %v1511, 1.0
  %v1576 = vadd.f32 %v1512, 1.0
  %v1577 = vadd.f32 %v1513, 1.0
  %v1578 = vadd.f32 %v1514, 1.0
  %v1579 = vadd.f32 %v1515, 1.0
  %v1580 = vadd.f32 %v1516, 1.0
  %v1581 = vadd.f32 %v1517, 1.0
  %v1582 = vadd.f32 %v1518, 1.0
  %v1583 = vadd.f32 %v1519, 1.0
  %v1584 = vadd.f32 %v1520, 1.0
  %v1585 = vadd.f32 %v1521, 1.0
  %v1586 = vadd.f32 %v1522, 1.0
  %v1587 = vadd.f32 %v1523, 1.0
  %v1588 = vadd.f32 %v1524, 1.0
  %v1589 = vadd.f32 %v1525, 1.0
  %v1590 = vadd.f32 %v1526, 1.0
  %v1591 = vadd.f32 %v1527, 1.0
  %v1592 = vadd.f32 %v1528, 1.0
  %v1593 = vmul.f32 %v1529, 0.5
  %v1594 = vmul.f32 %v1530, 0.5
  %v1595 = vmul.f32 %v1531, 0.5
  %v1596 = vmul.f32 %v1532, 0.5
  %v1597 = vmul.f32 %v1533, 0.5
  %v1598 = vmul.f32 %v1534, 0.5
  %v1599 = vmul.f32 %v1535, 0.5
  %v1600 = vmul.f32 %v1536, 0.5
  %v1601 = vmul.f32 %v1537, 0.5
  %v1602 = vmul.f32 %v1538, 0.5
  %v1603 = vmul.f32 %v1539, 0.5
  %v1604 = vmul.f32 %v1540, 0.5
  %v1605 = vmul.f32 %v1541, 0.5
  %v1606 = vmul.f32 %v1542, 0.5
  %v1607 = vmul.f32 %v1543, 0.5
  %v1608 = vmul.f32 %v1544, 0.5
  %v1609 = vmul.f32 %v1545, 0.5
  %v1610 = vmul.f32 %v1546, 0.5
  %v1611 = vmul.f32 %v1547, 0.5
  %v1612 = vmul.f32 %v1548, 0.5
  %v1613 = vmul.f32 %v1549, 0.5
  %v1614 = vmul.f32 %v1550, 0.5
  %v1615 = vmul.f32 %v1551, 0.5
  %v1616 = vmul.f32 %v1552, 0.5
  %v1617 = vmul.f32 %v1553, 0.5
  %v1618 = vmul.f32 %v1554, 0.5
  %v1619 = vmul.f32 %v1555, 0.5
  %v1620 = vmul.f32 %v1556, 0.5
  %v1621 = vmul.f32 %v1557, 0.5
  %v1622 = vmul.f32 %v1558, 0.5
  %v1623 = vmul.f32 %v1559, 0.5
  %v1624 = vmul.f32 %v1560, 0.5
  %v1625 = vmul.f32 %v1561, 0.5
  %v1626 = vmul.f32 %v1562, 0.5
  %v1627 = vmul.f32 %v1563, 0.5
  %v1628 = vmul.f32 %v1564, 0.5
  %v1629 = vmul.f32 %v1565, 0.5
  %v1630 = vmul.f32 %v1566, 0.5
  %v1631 = vmul.f32 %v1567, 0.5
  %v1632 = vmul.f32 %v1568, 0.5
  %v1633 = vmul.f32 %v1569, 0.5
  %v1634 = vmul.f32 %v1570, 0.5
  %v1635 = vmul.f32 %v1571, 0.5
  %v1636 = vmul.f32 %v1572, 0.5
  %v1637 = vmul.f32 %v1573, 0.5
  %v1638 = vmul.f32 %v1574, 0.5
  %v1639 = vmul.f32 %v1575, 0.5
  %v1640 = vmul.f32 %v1576, 0.5
  %v1641 = vmul.f32 %v1577, 0.5
  %v1642 = vmul.f32 %v1578, 0.5
  %v1643 = vmul.f32 %v1579, 0.5
  %v1644 = vmul.f32 %v1580, 0.5
  %v1645 = vmul.f32 %v1581, 0.5
  %v1646 = vmul.f32 %v1582, 0.5
  %v1647 = vmul.f32 %v1583, 0.5
  %v1648 = vmul.f32 %v1584, 0.5
  %v1649 = vmul.f32 %v1585, 0.5
  %v1650 = vmul.f32 %v1586, 0.5
  %v1651 = vmul.f32 %v1587, 0.5
  %v1652 = vmul.f32 %v1588, 0.5
  %v1653 = vmul.f32 %v1589, 0.5
  %v1654 = vmul.f32 %v1590, 0.5
  %v1655 = vmul.f32 %v1591, 0.5
  %v1656 = vmul.f32 %v1592, 0.5
  %v1657 = vsel %vm1321, %v1593, %v1465
  %v1658 = vsel %vm1321, %v1594, %v1466
  %v1659 = vsel %vm1321, %v1595, %v1467
  %v1660 = vsel %vm1321, %v1596, %v1468
  %v1661 = vsel %vm1322, %v1597, %v1469
  %v1662 = vsel %vm1322, %v1598, %v1470
  %v1663 = vsel %vm1322, %v1599, %v1471
  %v1664 = vsel %vm1322, %v1600, %v1472
  %v1665 = vsel %vm1323, %v1601, %v1473
  %v1666 = vsel %vm1323, %v1602, %v1474
  %v1667 = vsel %vm1323, %v1603, %v1475
  %v1668 = vsel %vm1323, %v1604, %v1476
  %v1669 = vsel %vm1324, %v1605, %v1477
  %v1670 = vsel %vm1324, %v1606, %v1478
  %v1671 = vsel %vm1324, %v1607, %v1479
  %v1672 = vsel %vm1324, %v1608, %v1480
  %v1673 = vsel %vm1325, %v1609, %v1481
  %v1674 = vsel %vm1325, %v1610, %v1482
  %v1675 = vsel %vm1325, %v1611, %v1483
  %v1676 = vsel %vm1325, %v1612, %v1484
  %v1677 = vsel %vm1326, %v1613, %v1485
  %v1678 = vsel %vm1326, %v1614, %v1486
  %v1679 = vsel %vm1326, %v1615, %v1487
  %v1680 = vsel %vm1326, %v1616, %v1488
  %v1681 = vsel %vm1327, %v1617, %v1489
  %v1682 = vsel %vm1327, %v1618, %v1490
  %v1683 = vsel %vm1327, %v1619, %v1491
  %v1684 = vsel %vm1327, %v1620, %v1492
  %v1685 = vsel %vm1328, %v1621, %v1493
  %v1686 = vsel %vm1328, %v1622, %v1494
  %v1687 = vsel %vm1328, %v1623, %v1495
  %v1688 = vsel %vm1328, %v1624, %v1496
  %v1689 = vsel %vm1329, %v1625, %v1497
  %v1690 = vsel %vm1329, %v1626, %v1498
  %v1691 = vsel %vm1329, %v1627, %v1499
  %v1692 = vsel %vm1329, %v1628, %v1500
  %v1693 = vsel %vm1330, %v1629, %v1501
  %v1694 = vsel %vm1330, %v1630, %v1502
  %v1695 = vsel %vm1330, %v1631, %v1503
  %v1696 = vsel %vm1330, %v1632, %v1504
  %v1697 = vsel %vm1331, %v1633, %v1505
  %v1698 = vsel %vm1331, %v1634, %v1506
  %v1699 = vsel %vm1331, %v1635, %v1507
  %v1700 = vsel %vm1331, %v1636, %v1508
  %v1701 = vsel %vm1332, %v1637, %v1509
  %v1702 = vsel %vm1332, %v1638, %v1510
  %v1703 = vsel %vm1332, %v1639, %v1511
  %v1704 = vsel %vm1332, %v1640, %v1512
  %v1705 = vsel %vm1333, %v1641, %v1513
  %v1706 = vsel %vm1333, %v1642, %v1514
  %v1707 = vsel %vm1333, %v1643, %v1515
  %v1708 = vsel %vm1333, %v1644, %v1516
  %v1709 = vsel %vm1334, %v1645, %v1517
  %v1710 = vsel %vm1334, %v1646, %v1518
  %v1711 = vsel %vm1334, %v1647, %v1519
  %v1712 = vsel %vm1334, %v1648, %v1520
  %v1713 = vsel %vm1335, %v1649, %v1521
  %v1714 = vsel %vm1335, %v1650, %v1522
  %v1715 = vsel %vm1335, %v1651, %v1523
  %v1716 = vsel %vm1335, %v1652, %v1524
  %v1717 = vsel %vm1336, %v1653, %v1525
  %v1718 = vsel %vm1336, %v1654, %v1526
  %v1719 = vsel %vm1336, %v1655, %v1527
  %v1720 = vsel %vm1336, %v1656, %v1528
  %v1721 = vld [vmem:[%s3] sm:$0xff]
  %v1722 = vld [vmem:[%s3 + $0x8] sm:$0xff]
  %v1723 = vld [vmem:[%s3 + $0x10] sm:$0xff]
  %v1724 = vld [vmem:[%s3 + $0x18] sm:$0xff]
  %v1725 = vld [vmem:[%s3 + $0x20] sm:$0xff]
  %v1726 = vld [vmem:[%s3 + $0x28] sm:$0xff]
  %v1727 = vld [vmem:[%s3 + $0x30] sm:$0xff]
  %v1728 = vld [vmem:[%s3 + $0x38] sm:$0xff]
  %v1729 = vld [vmem:[%s3 + $0x40] sm:$0xff]
  %v1730 = vld [vmem:[%s3 + $0x48] sm:$0xff]
  %v1731 = vld [vmem:[%s3 + $0x50] sm:$0xff]
  %v1732 = vld [vmem:[%s3 + $0x58] sm:$0xff]
  %v1733 = vld [vmem:[%s3 + $0x60] sm:$0xff]
  %v1734 = vld [vmem:[%s3 + $0x68] sm:$0xff]
  %v1735 = vld [vmem:[%s3 + $0x70] sm:$0xff]
  %v1736 = vld [vmem:[%s3 + $0x78] sm:$0xff]
  %v1737 = vmul.f32 %v1673, %v1721
  %v1738 = vmul.f32 %v1674, %v1722
  %v1739 = vmul.f32 %v1675, %v1723
  %v1740 = vmul.f32 %v1676, %v1724
  %v1741 = vmul.f32 %v1677, %v1725
  %v1742 = vmul.f32 %v1678, %v1726
  %v1743 = vmul.f32 %v1679, %v1727
  %v1744 = vmul.f32 %v1680, %v1728
  %v1745 = vmul.f32 %v1681, %v1729
  %v1746 = vmul.f32 %v1682, %v1730
  %v1747 = vmul.f32 %v1683, %v1731
  %v1748 = vmul.f32 %v1684, %v1732
  %v1749 = vmul.f32 %v1685, %v1733
  %v1750 = vmul.f32 %v1686, %v1734
  %v1751 = vmul.f32 %v1687, %v1735
  %v1752 = vmul.f32 %v1688, %v1736
  %v1753 = vmul.f32 %v1657, %v1705
  %v1754 = vmul.f32 %v1658, %v1706
  %v1755 = vmul.f32 %v1659, %v1707
  %v1756 = vmul.f32 %v1660, %v1708
  %v1757 = vmul.f32 %v1661, %v1709
  %v1758 = vmul.f32 %v1662, %v1710
  %v1759 = vmul.f32 %v1663, %v1711
  %v1760 = vmul.f32 %v1664, %v1712
  %v1761 = vmul.f32 %v1665, %v1713
  %v1762 = vmul.f32 %v1666, %v1714
  %v1763 = vmul.f32 %v1667, %v1715
  %v1764 = vmul.f32 %v1668, %v1716
  %v1765 = vmul.f32 %v1669, %v1717
  %v1766 = vmul.f32 %v1670, %v1718
  %v1767 = vmul.f32 %v1671, %v1719
  %v1768 = vmul.f32 %v1672, %v1720
  %v1769 = vadd.f32 %v1737, %v1753
  %v1770 = vadd.f32 %v1738, %v1754
  %v1771 = vadd.f32 %v1739, %v1755
  %v1772 = vadd.f32 %v1740, %v1756
  %v1773 = vadd.f32 %v1741, %v1757
  %v1774 = vadd.f32 %v1742, %v1758
  %v1775 = vadd.f32 %v1743, %v1759
  %v1776 = vadd.f32 %v1744, %v1760
  %v1777 = vadd.f32 %v1745, %v1761
  %v1778 = vadd.f32 %v1746, %v1762
  %v1779 = vadd.f32 %v1747, %v1763
  %v1780 = vadd.f32 %v1748, %v1764
  %v1781 = vadd.f32 %v1749, %v1765
  %v1782 = vadd.f32 %v1750, %v1766
  %v1783 = vadd.f32 %v1751, %v1767
  %v1784 = vadd.f32 %v1752, %v1768
  %v1785 = vtanh.pop %v1769
  %v1786 = vtanh.pop %v1770
  %v1787 = vtanh.pop %v1771
  %v1788 = vtanh.pop %v1772
  %v1789 = vtanh.pop %v1773
  %v1790 = vtanh.pop %v1774
  %v1791 = vtanh.pop %v1775
  %v1792 = vtanh.pop %v1776
  %v1793 = vtanh.pop %v1777
  %v1794 = vtanh.pop %v1778
  %v1795 = vtanh.pop %v1779
  %v1796 = vtanh.pop %v1780
  %v1797 = vtanh.pop %v1781
  %v1798 = vtanh.pop %v1782
  %v1799 = vtanh.pop %v1783
  %v1800 = vtanh.pop %v1784
  %v1801 = vmul.f32 %v1689, %v1785
  %v1802 = vmul.f32 %v1690, %v1786
  %v1803 = vmul.f32 %v1691, %v1787
  %v1804 = vmul.f32 %v1692, %v1788
  %v1805 = vmul.f32 %v1693, %v1789
  %v1806 = vmul.f32 %v1694, %v1790
  %v1807 = vmul.f32 %v1695, %v1791
  %v1808 = vmul.f32 %v1696, %v1792
  %v1809 = vmul.f32 %v1697, %v1793
  %v1810 = vmul.f32 %v1698, %v1794
  %v1811 = vmul.f32 %v1699, %v1795
  %v1812 = vmul.f32 %v1700, %v1796
  %v1813 = vmul.f32 %v1701, %v1797
  %v1814 = vmul.f32 %v1702, %v1798
  %v1815 = vmul.f32 %v1703, %v1799
  %v1816 = vmul.f32 %v1704, %v1800
  %1817 = vst [vmem:[%s4] sm:$0xff] %v1801
  %1818 = vst [vmem:[%s4 + $0x8] sm:$0xff] %v1802
  %1819 = vst [vmem:[%s4 + $0x10] sm:$0xff] %v1803
  %1820 = vst [vmem:[%s4 + $0x18] sm:$0xff] %v1804
  %1821 = vst [vmem:[%s4 + $0x20] sm:$0xff] %v1805
  %1822 = vst [vmem:[%s4 + $0x28] sm:$0xff] %v1806
  %1823 = vst [vmem:[%s4 + $0x30] sm:$0xff] %v1807
  %1824 = vst [vmem:[%s4 + $0x38] sm:$0xff] %v1808
  %1825 = vst [vmem:[%s4 + $0x40] sm:$0xff] %v1809
  %1826 = vst [vmem:[%s4 + $0x48] sm:$0xff] %v1810
  %1827 = vst [vmem:[%s4 + $0x50] sm:$0xff] %v1811
  %1828 = vst [vmem:[%s4 + $0x58] sm:$0xff] %v1812
  %1829 = vst [vmem:[%s4 + $0x60] sm:$0xff] %v1813
  %1830 = vst [vmem:[%s4 + $0x68] sm:$0xff] %v1814
  %1831 = vst [vmem:[%s4 + $0x70] sm:$0xff] %v1815
  %1832 = vst [vmem:[%s4 + $0x78] sm:$0xff] %v1816
  %1833 = vst [vmem:[%s5] sm:$0xff] %v1769
  %1834 = vst [vmem:[%s5 + $0x8] sm:$0xff] %v1770
  %1835 = vst [vmem:[%s5 + $0x10] sm:$0xff] %v1771
  %1836 = vst [vmem:[%s5 + $0x18] sm:$0xff] %v1772
  %1837 = vst [vmem:[%s5 + $0x20] sm:$0xff] %v1773
  %1838 = vst [vmem:[%s5 + $0x28] sm:$0xff] %v1774
  %1839 = vst [vmem:[%s5 + $0x30] sm:$0xff] %v1775
  %1840 = vst [vmem:[%s5 + $0x38] sm:$0xff] %v1776
  %1841 = vst [vmem:[%s5 + $0x40] sm:$0xff] %v1777
  %1842 = vst [vmem:[%s5 + $0x48] sm:$0xff] %v1778
  %1843 = vst [vmem:[%s5 + $0x50] sm:$0xff] %v1779
  %1844 = vst [vmem:[%s5 + $0x58] sm:$0xff] %v1780
  %1845 = vst [vmem:[%s5 + $0x60] sm:$0xff] %v1781
  %1846 = vst [vmem:[%s5 + $0x68] sm:$0xff] %v1782
  %1847 = vst [vmem:[%s5 + $0x70] sm:$0xff] %v1783
  %1848 = vst [vmem:[%s5 + $0x78] sm:$0xff] %v1784
  // Predicated region
  $region18: #{convlstm_cell_forward.1} parent=0 // pred_check
    _
  $region19: #{convlstm_cell_forward.1} parent=0 // pred_check_branch
    %1850 = sbr.rel (0) target = $region21
  $region20: #{convlstm_cell_forward.1} parent=0 // pred_region
    _
  $region21: #{convlstm_cell_forward.1} parent=0 // pred_fallthru
    _
  // Predicated region
  $region22: #{convlstm_cell_forward.1} parent=0 // pred_check
    _
  $region23: #{convlstm_cell_forward.1} parent=0 // pred_check_branch
    %1852 = sbr.rel (0) target = $region25
  $region24: #{convlstm_cell_forward.1} parent=0 // pred_region
    _
  $region25: #{convlstm_cell_forward.1} parent=0 // pred_fallthru
    _
  // Predicated region
  $region26: #{convlstm_cell_forward.1} parent=0 // pred_check
    _
  $region27: #{convlstm_cell_forward.1} parent=0 // pred_check_branch
    %1854 = sbr.rel (0) target = $region29
  $region28: #{convlstm_cell_forward.1} parent=0 // pred_region
    _
  $region29: #{convlstm_cell_forward.1} parent=0 // pred_fallthru
    _
  // Predicated region
  $region30: #{convlstm_cell_forward.1} parent=0 // pred_check
    _
  $region31: #{convlstm_cell_forward.1} parent=0 // pred_check_branch
    %1856 = sbr.rel (0) target = $region33
  $region32: #{convlstm_cell_forward.1} parent=0 // pred_region
    _
  $region33: #{convlstm_cell_forward.1} parent=0 // pred_fallthru
    _

</llo_original>
